<compile_context>
chip_gen: v7x
topology: tpu7x:2x2x1
jax: 0.10.0
libtpu: 0.0.40
codegen_flags: <defaults>
</compile_context>

<pallas_src>
import jax
import jax.numpy as jnp
import numpy as np
from jax.experimental import pallas as pl
from jax.experimental.pallas import tpu as pltpu


def _vmem_spec():
    return pl.BlockSpec(memory_space=pltpu.MemorySpace.VMEM)


# -------------------- constant gather matrices (host, numpy) ----------------

def _conv_tap_gathers(h, w, k, pad):
    """0/1 matrices G[t] of shape (h*w, oh*ow). Column (y, x) of tap t=(i, j)
    selects input pixel (y+i-pad, x+j-pad); out-of-range columns stay all-zero,
    which implements the zero padding."""
    oh, ow = h + 2 * pad - k + 1, w + 2 * pad - k + 1
    g = np.zeros((k * k, h * w, oh * ow), np.float32)
    for i in range(k):
        for j in range(k):
            t = i * k + j
            for y in range(oh):
                sy = y + i - pad
                if not 0 <= sy < h:
                    continue
                for x in range(ow):
                    sx = x + j - pad
                    if 0 <= sx < w:
                        g[t, sy * w + sx, y * ow + x] = 1.0
    return g, oh, ow


def _pool_tap_gathers(h, w):
    """0/1 matrices S[t] of shape (h*w, ph*pw) selecting window element
    t=(dh, dw) of each 2x2 / stride-2 pooling window (floor mode)."""
    ph, pw = h // 2, w // 2
    s = np.zeros((4, h * w, ph * pw), np.float32)
    for dh in range(2):
        for dw in range(2):
            t = dh * 2 + dw
            for y in range(ph):
                for x in range(pw):
                    s[t, (2 * y + dh) * w + (2 * x + dw), y * pw + x] = 1.0
    return s, ph, pw


# ----------------------------- fused forward --------------------------------

def build_cnn_health_hunger_forward(batch, height, width, eps=1e-5):
    C = 4                                    # channel count fixed by the module
    N = batch

    g1_np, oh1, ow1 = _conv_tap_gathers(height, width, k=2, pad=1)
    s1_np, ph1, pw1 = _pool_tap_gathers(oh1, ow1)
    g2_np, oh2, ow2 = _conv_tap_gathers(ph1, pw1, k=1, pad=1)
    g2_np = g2_np[0]                         # 1x1 conv: single tap
    s2_np, ph2, pw2 = _pool_tap_gathers(oh2, ow2)
    hw2 = ph2 * pw2                          # per-channel flattened size for fc

    def kernel(x0_ref, g1_ref, w1_ref, sh1_ref, s1_ref,
               g2_ref, w2_ref, sh2_ref, s2_ref, fcw_ref, fcb_ref, o_ref):
        f32 = jnp.float32
        x0 = x0_ref[...]                                       # (N*C, H*W)

        # conv1 (k=2, pad=1) + folded BN + ReLU: 4 shifted-tap matmuls.
        acc = None
        for t in range(4):
            tap = jnp.dot(x0, g1_ref[t], preferred_element_type=f32)
            contrib = jnp.dot(w1_ref[t], tap, preferred_element_type=f32)
            acc = contrib if acc is None else acc + contrib
        a1 = jnp.maximum(acc + sh1_ref[...], 0.0)              # (N*C, oh1*ow1)

        # maxpool 2x2 stride 2: max over the 4 window-element gathers.
        p1 = None
        for t in range(4):
            cand = jnp.dot(a1, s1_ref[t], preferred_element_type=f32)
            p1 = cand if p1 is None else jnp.maximum(p1, cand)  # (N*C, ph1*pw1)

        # conv2 (k=1, pad=1) + folded BN + ReLU (padding border -> relu(shift)).
        z2 = jnp.dot(w2_ref[...],
                     jnp.dot(p1, g2_ref[...], preferred_element_type=f32),
                     preferred_element_type=f32)
        a2 = jnp.maximum(z2 + sh2_ref[...], 0.0)               # (N*C, oh2*ow2)

        # maxpool 2x2 stride 2.
        p2 = None
        for t in range(4):
            cand = jnp.dot(a2, s2_ref[t], preferred_element_type=f32)
            p2 = cand if p2 is None else jnp.maximum(p2, cand)  # (N*C, hw2)
        # p2 rows are (n, c), columns are h*pw2 + w  ==  NCHW flatten order.

        # linear: out[n, :] = fc_b + sum_c p2[n*C+c, :] @ fcw_r[c]
        for n in range(N):
            blk = p2[n * C:(n + 1) * C, :]                     # (C, hw2)
            row = fcb_ref[...]                                 # (1, out_f)
            for c in range(C):
                row = row + jnp.dot(blk[c:c + 1, :], fcw_ref[c],
                                    preferred_element_type=f32)
            o_ref[n:n + 1, :] = row

    @jax.jit
    def forward(x, p):
        out_f = p["fc_w"].shape[0]
        assert p["fc_w"].shape[1] == C * hw2, "fc in_features mismatch"
        eye = jnp.eye(N, dtype=jnp.float32)

        # Fold conv bias + inference BatchNorm into the conv weights (host).
        s1 = p["bn1_gamma"] / jnp.sqrt(p["bn1_var"] + eps)
        sh1 = (p["conv1_b"] - p["bn1_mean"]) * s1 + p["bn1_beta"]
        w1f = p["conv1_w"] * s1[:, None, None, None]           # (4,4,2,2)
        w1blk = jnp.stack([jnp.kron(eye, w1f[:, :, i, j])      # tap order i*2+j
                           for i in range(2) for j in range(2)])
        sh1_rows = jnp.tile(sh1, N).reshape(N * C, 1)

        s2 = p["bn2_gamma"] / jnp.sqrt(p["bn2_var"] + eps)
        sh2 = (p["conv2_b"] - p["bn2_mean"]) * s2 + p["bn2_beta"]
        w2f = p["conv2_w"][:, :, 0, 0] * s2[:, None]           # (4,4)
        w2blk = jnp.kron(eye, w2f)                             # (N*C, N*C)
        sh2_rows = jnp.tile(sh2, N).reshape(N * C, 1)

        # fc weights regrouped per input channel: fcw_r[c, m, o] = fc_w[o, c*hw2+m]
        fcw_r = jnp.transpose(p["fc_w"].reshape(out_f, C, hw2), (1, 2, 0))
        fcb_r = p["fc_b"].reshape(1, out_f)

        # NCHW -> (N*C rows, H*W lanes); rows are (n, c) n-major.
        x0 = x.astype(jnp.float32).reshape(N * C, height * width)

        return pl.pallas_call(
            kernel,
            out_shape=jax.ShapeDtypeStruct((N, out_f), jnp.float32),
            in_specs=[_vmem_spec()] * 11,
            out_specs=_vmem_spec(),
        )(x0, g1_np, w1blk, sh1_rows, s1_np,
          g2_np, w2blk, sh2_rows, s2_np, fcw_r, fcb_r)

    return forward


# ----------------------------- parameters / check ---------------------------

def init_params(key):
    ks = jax.random.split(key, 16)
    p = {}
    p["conv1_w"] = 0.2 * jax.random.normal(ks[0], (4, 4, 2, 2), jnp.float32)
    p["conv1_b"] = 0.1 * jax.random.normal(ks[1], (4,), jnp.float32)
    p["bn1_gamma"] = 1.0 + 0.1 * jax.random.normal(ks[2], (4,), jnp.float32)
    p["bn1_beta"] = 0.1 * jax.random.normal(ks[3], (4,), jnp.float32)
    p["bn1_mean"] = 0.05 * jax.random.normal(ks[4], (4,), jnp.float32)
    p["bn1_var"] = 0.5 + jax.random.uniform(ks[5], (4,), jnp.float32)
    p["conv2_w"] = 0.2 * jax.random.normal(ks[6], (4, 4, 1, 1), jnp.float32)
    p["conv2_b"] = 0.1 * jax.random.normal(ks[7], (4,), jnp.float32)
    p["bn2_gamma"] = 1.0 + 0.1 * jax.random.normal(ks[8], (4,), jnp.float32)
    p["bn2_beta"] = 0.1 * jax.random.normal(ks[9], (4,), jnp.float32)
    p["bn2_mean"] = 0.05 * jax.random.normal(ks[10], (4,), jnp.float32)
    p["bn2_var"] = 0.5 + jax.random.uniform(ks[11], (4,), jnp.float32)
    p["fc_w"] = 0.1 * jax.random.normal(ks[12], (2, 4 * 2 * 7), jnp.float32)
    p["fc_b"] = 0.1 * jax.random.normal(ks[13], (2,), jnp.float32)
    return p


def reference_forward(x, p, eps=1e-5):
    def conv(x, w, b, pad):
        y = jax.lax.conv_general_dilated(
            x, w, window_strides=(1, 1), padding=[(pad, pad), (pad, pad)],
            dimension_numbers=("NCHW", "OIHW", "NCHW"))
        return y + b.reshape(1, -1, 1, 1)

    def bn(x, g, bt, m, v):
        return ((x - m.reshape(1, -1, 1, 1)) / jnp.sqrt(v.reshape(1, -1, 1, 1) + eps)
                * g.reshape(1, -1, 1, 1) + bt.reshape(1, -1, 1, 1))

    def pool(x):
        return jax.lax.reduce_window(x, -jnp.inf, jax.lax.max,
                                     (1, 1, 2, 2), (1, 1, 2, 2), "VALID")

    h = jnp.maximum(bn(conv(x, p["conv1_w"], p["conv1_b"], 1),
                       p["bn1_gamma"], p["bn1_beta"], p["bn1_mean"], p["bn1_var"]), 0.0)
    h = pool(h)
    h = jnp.maximum(bn(conv(h, p["conv2_w"], p["conv2_b"], 1),
                       p["bn2_gamma"], p["bn2_beta"], p["bn2_mean"], p["bn2_var"]), 0.0)
    h = pool(h)
    flat = h.reshape(h.shape[0], -1)
    return flat @ p["fc_w"].T + p["fc_b"]


if __name__ == "__main__":
    key = jax.random.PRNGKey(0)
    k_x, k_p = jax.random.split(key)
    # H=4, W=25: after conv(k=2,p=1)+pool and conv(k=1,p=1)+pool the feature
    # map is (4, 2, 7) -> linear_input_size = 4*2*7 = 56, as in the module.
    N, H, W = 2, 4, 25
    x = jax.random.normal(k_x, (N, 4, H, W), jnp.float32)
    params = init_params(k_p)

    forward = build_cnn_health_hunger_forward(N, H, W)
    out = jax.block_until_ready(forward(x, params))

    ref = jax.block_until_ready(reference_forward(x, params))
    assert out.shape == (N, 2), out.shape
    np.testing.assert_allclose(np.asarray(out), np.asarray(ref), atol=1e-4, rtol=1e-4)
    print("KERNEL_OK")
</pallas_src>

<mosaic_0001>
module attributes {stable_mosaic.version = 11 : i64} {
  func.func @kernel(%arg0: memref<8x100xf32, #tpu.memory_space<vmem>>, %arg1: memref<4x100x130xf32, #tpu.memory_space<vmem>>, %arg2: memref<4x8x8xf32, #tpu.memory_space<vmem>>, %arg3: memref<8x1xf32, #tpu.memory_space<vmem>>, %arg4: memref<4x130x26xf32, #tpu.memory_space<vmem>>, %arg5: memref<26x60xf32, #tpu.memory_space<vmem>>, %arg6: memref<8x8xf32, #tpu.memory_space<vmem>>, %arg7: memref<8x1xf32, #tpu.memory_space<vmem>>, %arg8: memref<4x60x14xf32, #tpu.memory_space<vmem>>, %arg9: memref<4x14x2xf32, #tpu.memory_space<vmem>>, %arg10: memref<1x2xf32, #tpu.memory_space<vmem>>, %arg11: memref<2x2xf32, #tpu.memory_space<vmem>>) attributes {dimension_semantics = [], scalar_prefetch = 0 : i64, scratch_operands = 0 : i64, tpu.core_type = #tpu.core_type<tc>} {
    %c0 = arith.constant 0 : index
    %c0_0 = arith.constant 0 : index
    %0 = vector.load %arg0[%c0, %c0_0] : memref<8x100xf32, #tpu.memory_space<vmem>>, vector<8x100xf32>
    %c0_1 = arith.constant 0 : index
    %c0_2 = arith.constant 0 : index
    %c0_3 = arith.constant 0 : index
    %1 = vector.load %arg1[%c0_1, %c0_2, %c0_3] : memref<4x100x130xf32, #tpu.memory_space<vmem>>, vector<1x100x130xf32>
    %2 = vector.shape_cast %1 : vector<1x100x130xf32> to vector<100x130xf32>
    %cst = arith.constant dense<0.000000e+00> : vector<8x130xf32>
    %3 = tpu.matmul %0, %2, %cst {dimension_numbers = #tpu.dot_dimension_numbers<[1], [0], [0], [1], [0, 0, 1, 1], [], []>} : vector<8x100xf32>, vector<100x130xf32>, vector<8x130xf32> -> vector<8x130xf32>
    %c0_4 = arith.constant 0 : index
    %c0_5 = arith.constant 0 : index
    %c0_6 = arith.constant 0 : index
    %4 = vector.load %arg2[%c0_4, %c0_5, %c0_6] : memref<4x8x8xf32, #tpu.memory_space<vmem>>, vector<1x8x8xf32>
    %5 = vector.shape_cast %4 : vector<1x8x8xf32> to vector<8x8xf32>
    %cst_7 = arith.constant dense<0.000000e+00> : vector<8x130xf32>
    %6 = tpu.matmul %5, %3, %cst_7 {dimension_numbers = #tpu.dot_dimension_numbers<[1], [0], [0], [1], [0, 0, 1, 1], [], []>} : vector<8x8xf32>, vector<8x130xf32>, vector<8x130xf32> -> vector<8x130xf32>
    %c1 = arith.constant 1 : index
    %c0_8 = arith.constant 0 : index
    %c0_9 = arith.constant 0 : index
    %7 = vector.load %arg1[%c1, %c0_8, %c0_9] : memref<4x100x130xf32, #tpu.memory_space<vmem>>, vector<1x100x130xf32>
    %8 = vector.shape_cast %7 : vector<1x100x130xf32> to vector<100x130xf32>
    %cst_10 = arith.constant dense<0.000000e+00> : vector<8x130xf32>
    %9 = tpu.matmul %0, %8, %cst_10 {dimension_numbers = #tpu.dot_dimension_numbers<[1], [0], [0], [1], [0, 0, 1, 1], [], []>} : vector<8x100xf32>, vector<100x130xf32>, vector<8x130xf32> -> vector<8x130xf32>
    %c1_11 = arith.constant 1 : index
    %c0_12 = arith.constant 0 : index
    %c0_13 = arith.constant 0 : index
    %10 = vector.load %arg2[%c1_11, %c0_12, %c0_13] : memref<4x8x8xf32, #tpu.memory_space<vmem>>, vector<1x8x8xf32>
    %11 = vector.shape_cast %10 : vector<1x8x8xf32> to vector<8x8xf32>
    %cst_14 = arith.constant dense<0.000000e+00> : vector<8x130xf32>
    %12 = tpu.matmul %11, %9, %cst_14 {dimension_numbers = #tpu.dot_dimension_numbers<[1], [0], [0], [1], [0, 0, 1, 1], [], []>} : vector<8x8xf32>, vector<8x130xf32>, vector<8x130xf32> -> vector<8x130xf32>
    %13 = arith.addf %6, %12 : vector<8x130xf32>
    %c2 = arith.constant 2 : index
    %c0_15 = arith.constant 0 : index
    %c0_16 = arith.constant 0 : index
    %14 = vector.load %arg1[%c2, %c0_15, %c0_16] : memref<4x100x130xf32, #tpu.memory_space<vmem>>, vector<1x100x130xf32>
    %15 = vector.shape_cast %14 : vector<1x100x130xf32> to vector<100x130xf32>
    %cst_17 = arith.constant dense<0.000000e+00> : vector<8x130xf32>
    %16 = tpu.matmul %0, %15, %cst_17 {dimension_numbers = #tpu.dot_dimension_numbers<[1], [0], [0], [1], [0, 0, 1, 1], [], []>} : vector<8x100xf32>, vector<100x130xf32>, vector<8x130xf32> -> vector<8x130xf32>
    %c2_18 = arith.constant 2 : index
    %c0_19 = arith.constant 0 : index
    %c0_20 = arith.constant 0 : index
    %17 = vector.load %arg2[%c2_18, %c0_19, %c0_20] : memref<4x8x8xf32, #tpu.memory_space<vmem>>, vector<1x8x8xf32>
    %18 = vector.shape_cast %17 : vector<1x8x8xf32> to vector<8x8xf32>
    %cst_21 = arith.constant dense<0.000000e+00> : vector<8x130xf32>
    %19 = tpu.matmul %18, %16, %cst_21 {dimension_numbers = #tpu.dot_dimension_numbers<[1], [0], [0], [1], [0, 0, 1, 1], [], []>} : vector<8x8xf32>, vector<8x130xf32>, vector<8x130xf32> -> vector<8x130xf32>
    %20 = arith.addf %13, %19 : vector<8x130xf32>
    %c3 = arith.constant 3 : index
    %c0_22 = arith.constant 0 : index
    %c0_23 = arith.constant 0 : index
    %21 = vector.load %arg1[%c3, %c0_22, %c0_23] : memref<4x100x130xf32, #tpu.memory_space<vmem>>, vector<1x100x130xf32>
    %22 = vector.shape_cast %21 : vector<1x100x130xf32> to vector<100x130xf32>
    %cst_24 = arith.constant dense<0.000000e+00> : vector<8x130xf32>
    %23 = tpu.matmul %0, %22, %cst_24 {dimension_numbers = #tpu.dot_dimension_numbers<[1], [0], [0], [1], [0, 0, 1, 1], [], []>} : vector<8x100xf32>, vector<100x130xf32>, vector<8x130xf32> -> vector<8x130xf32>
    %c3_25 = arith.constant 3 : index
    %c0_26 = arith.constant 0 : index
    %c0_27 = arith.constant 0 : index
    %24 = vector.load %arg2[%c3_25, %c0_26, %c0_27] : memref<4x8x8xf32, #tpu.memory_space<vmem>>, vector<1x8x8xf32>
    %25 = vector.shape_cast %24 : vector<1x8x8xf32> to vector<8x8xf32>
    %cst_28 = arith.constant dense<0.000000e+00> : vector<8x130xf32>
    %26 = tpu.matmul %25, %23, %cst_28 {dimension_numbers = #tpu.dot_dimension_numbers<[1], [0], [0], [1], [0, 0, 1, 1], [], []>} : vector<8x8xf32>, vector<8x130xf32>, vector<8x130xf32> -> vector<8x130xf32>
    %27 = arith.addf %20, %26 : vector<8x130xf32>
    %c0_29 = arith.constant 0 : index
    %c0_30 = arith.constant 0 : index
    %28 = vector.load %arg3[%c0_29, %c0_30] : memref<8x1xf32, #tpu.memory_space<vmem>>, vector<8x1xf32>
    %29 = vector.broadcast %28 : vector<8x1xf32> to vector<8x130xf32>
    %30 = arith.addf %27, %29 : vector<8x130xf32>
    %cst_31 = arith.constant 0.000000e+00 : f32
    %31 = vector.broadcast %cst_31 : f32 to vector<8x130xf32>
    %32 = arith.maximumf %30, %31 : vector<8x130xf32>
    %c0_32 = arith.constant 0 : index
    %c0_33 = arith.constant 0 : index
    %c0_34 = arith.constant 0 : index
    %33 = vector.load %arg4[%c0_32, %c0_33, %c0_34] : memref<4x130x26xf32, #tpu.memory_space<vmem>>, vector<1x130x26xf32>
    %34 = vector.shape_cast %33 : vector<1x130x26xf32> to vector<130x26xf32>
    %cst_35 = arith.constant dense<0.000000e+00> : vector<8x26xf32>
    %35 = tpu.matmul %32, %34, %cst_35 {dimension_numbers = #tpu.dot_dimension_numbers<[1], [0], [0], [1], [0, 0, 1, 1], [], []>} : vector<8x130xf32>, vector<130x26xf32>, vector<8x26xf32> -> vector<8x26xf32>
    %c1_36 = arith.constant 1 : index
    %c0_37 = arith.constant 0 : index
    %c0_38 = arith.constant 0 : index
    %36 = vector.load %arg4[%c1_36, %c0_37, %c0_38] : memref<4x130x26xf32, #tpu.memory_space<vmem>>, vector<1x130x26xf32>
    %37 = vector.shape_cast %36 : vector<1x130x26xf32> to vector<130x26xf32>
    %cst_39 = arith.constant dense<0.000000e+00> : vector<8x26xf32>
    %38 = tpu.matmul %32, %37, %cst_39 {dimension_numbers = #tpu.dot_dimension_numbers<[1], [0], [0], [1], [0, 0, 1, 1], [], []>} : vector<8x130xf32>, vector<130x26xf32>, vector<8x26xf32> -> vector<8x26xf32>
    %39 = arith.maximumf %35, %38 : vector<8x26xf32>
    %c2_40 = arith.constant 2 : index
    %c0_41 = arith.constant 0 : index
    %c0_42 = arith.constant 0 : index
    %40 = vector.load %arg4[%c2_40, %c0_41, %c0_42] : memref<4x130x26xf32, #tpu.memory_space<vmem>>, vector<1x130x26xf32>
    %41 = vector.shape_cast %40 : vector<1x130x26xf32> to vector<130x26xf32>
    %cst_43 = arith.constant dense<0.000000e+00> : vector<8x26xf32>
    %42 = tpu.matmul %32, %41, %cst_43 {dimension_numbers = #tpu.dot_dimension_numbers<[1], [0], [0], [1], [0, 0, 1, 1], [], []>} : vector<8x130xf32>, vector<130x26xf32>, vector<8x26xf32> -> vector<8x26xf32>
    %43 = arith.maximumf %39, %42 : vector<8x26xf32>
    %c3_44 = arith.constant 3 : index
    %c0_45 = arith.constant 0 : index
    %c0_46 = arith.constant 0 : index
    %44 = vector.load %arg4[%c3_44, %c0_45, %c0_46] : memref<4x130x26xf32, #tpu.memory_space<vmem>>, vector<1x130x26xf32>
    %45 = vector.shape_cast %44 : vector<1x130x26xf32> to vector<130x26xf32>
    %cst_47 = arith.constant dense<0.000000e+00> : vector<8x26xf32>
    %46 = tpu.matmul %32, %45, %cst_47 {dimension_numbers = #tpu.dot_dimension_numbers<[1], [0], [0], [1], [0, 0, 1, 1], [], []>} : vector<8x130xf32>, vector<130x26xf32>, vector<8x26xf32> -> vector<8x26xf32>
    %47 = arith.maximumf %43, %46 : vector<8x26xf32>
    %c0_48 = arith.constant 0 : index
    %c0_49 = arith.constant 0 : index
    %48 = vector.load %arg6[%c0_48, %c0_49] : memref<8x8xf32, #tpu.memory_space<vmem>>, vector<8x8xf32>
    %c0_50 = arith.constant 0 : index
    %c0_51 = arith.constant 0 : index
    %49 = vector.load %arg5[%c0_50, %c0_51] : memref<26x60xf32, #tpu.memory_space<vmem>>, vector<26x60xf32>
    %cst_52 = arith.constant dense<0.000000e+00> : vector<8x60xf32>
    %50 = tpu.matmul %47, %49, %cst_52 {dimension_numbers = #tpu.dot_dimension_numbers<[1], [0], [0], [1], [0, 0, 1, 1], [], []>} : vector<8x26xf32>, vector<26x60xf32>, vector<8x60xf32> -> vector<8x60xf32>
    %cst_53 = arith.constant dense<0.000000e+00> : vector<8x60xf32>
    %51 = tpu.matmul %48, %50, %cst_53 {dimension_numbers = #tpu.dot_dimension_numbers<[1], [0], [0], [1], [0, 0, 1, 1], [], []>} : vector<8x8xf32>, vector<8x60xf32>, vector<8x60xf32> -> vector<8x60xf32>
    %c0_54 = arith.constant 0 : index
    %c0_55 = arith.constant 0 : index
    %52 = vector.load %arg7[%c0_54, %c0_55] : memref<8x1xf32, #tpu.memory_space<vmem>>, vector<8x1xf32>
    %53 = vector.broadcast %52 : vector<8x1xf32> to vector<8x60xf32>
    %54 = arith.addf %51, %53 : vector<8x60xf32>
    %cst_56 = arith.constant 0.000000e+00 : f32
    %55 = vector.broadcast %cst_56 : f32 to vector<8x60xf32>
    %56 = arith.maximumf %54, %55 : vector<8x60xf32>
    %c0_57 = arith.constant 0 : index
    %c0_58 = arith.constant 0 : index
    %c0_59 = arith.constant 0 : index
    %57 = vector.load %arg8[%c0_57, %c0_58, %c0_59] : memref<4x60x14xf32, #tpu.memory_space<vmem>>, vector<1x60x14xf32>
    %58 = vector.shape_cast %57 : vector<1x60x14xf32> to vector<60x14xf32>
    %cst_60 = arith.constant dense<0.000000e+00> : vector<8x14xf32>
    %59 = tpu.matmul %56, %58, %cst_60 {dimension_numbers = #tpu.dot_dimension_numbers<[1], [0], [0], [1], [0, 0, 1, 1], [], []>} : vector<8x60xf32>, vector<60x14xf32>, vector<8x14xf32> -> vector<8x14xf32>
    %c1_61 = arith.constant 1 : index
    %c0_62 = arith.constant 0 : index
    %c0_63 = arith.constant 0 : index
    %60 = vector.load %arg8[%c1_61, %c0_62, %c0_63] : memref<4x60x14xf32, #tpu.memory_space<vmem>>, vector<1x60x14xf32>
    %61 = vector.shape_cast %60 : vector<1x60x14xf32> to vector<60x14xf32>
    %cst_64 = arith.constant dense<0.000000e+00> : vector<8x14xf32>
    %62 = tpu.matmul %56, %61, %cst_64 {dimension_numbers = #tpu.dot_dimension_numbers<[1], [0], [0], [1], [0, 0, 1, 1], [], []>} : vector<8x60xf32>, vector<60x14xf32>, vector<8x14xf32> -> vector<8x14xf32>
    %63 = arith.maximumf %59, %62 : vector<8x14xf32>
    %c2_65 = arith.constant 2 : index
    %c0_66 = arith.constant 0 : index
    %c0_67 = arith.constant 0 : index
    %64 = vector.load %arg8[%c2_65, %c0_66, %c0_67] : memref<4x60x14xf32, #tpu.memory_space<vmem>>, vector<1x60x14xf32>
    %65 = vector.shape_cast %64 : vector<1x60x14xf32> to vector<60x14xf32>
    %cst_68 = arith.constant dense<0.000000e+00> : vector<8x14xf32>
    %66 = tpu.matmul %56, %65, %cst_68 {dimension_numbers = #tpu.dot_dimension_numbers<[1], [0], [0], [1], [0, 0, 1, 1], [], []>} : vector<8x60xf32>, vector<60x14xf32>, vector<8x14xf32> -> vector<8x14xf32>
    %67 = arith.maximumf %63, %66 : vector<8x14xf32>
    %c3_69 = arith.constant 3 : index
    %c0_70 = arith.constant 0 : index
    %c0_71 = arith.constant 0 : index
    %68 = vector.load %arg8[%c3_69, %c0_70, %c0_71] : memref<4x60x14xf32, #tpu.memory_space<vmem>>, vector<1x60x14xf32>
    %69 = vector.shape_cast %68 : vector<1x60x14xf32> to vector<60x14xf32>
    %cst_72 = arith.constant dense<0.000000e+00> : vector<8x14xf32>
    %70 = tpu.matmul %56, %69, %cst_72 {dimension_numbers = #tpu.dot_dimension_numbers<[1], [0], [0], [1], [0, 0, 1, 1], [], []>} : vector<8x60xf32>, vector<60x14xf32>, vector<8x14xf32> -> vector<8x14xf32>
    %71 = arith.maximumf %67, %70 : vector<8x14xf32>
    %72 = vector.extract_strided_slice %71 {offsets = [0, 0], sizes = [4, 14], strides = [1, 1]} : vector<8x14xf32> to vector<4x14xf32>
    %c0_73 = arith.constant 0 : index
    %c0_74 = arith.constant 0 : index
    %73 = vector.load %arg10[%c0_73, %c0_74] : memref<1x2xf32, #tpu.memory_space<vmem>>, vector<1x2xf32>
    %74 = vector.extract_strided_slice %72 {offsets = [0, 0], sizes = [1, 14], strides = [1, 1]} : vector<4x14xf32> to vector<1x14xf32>
    %c0_75 = arith.constant 0 : index
    %c0_76 = arith.constant 0 : index
    %c0_77 = arith.constant 0 : index
    %75 = vector.load %arg9[%c0_75, %c0_76, %c0_77] : memref<4x14x2xf32, #tpu.memory_space<vmem>>, vector<1x14x2xf32>
    %76 = vector.shape_cast %75 : vector<1x14x2xf32> to vector<14x2xf32>
    %cst_78 = arith.constant dense<0.000000e+00> : vector<1x2xf32>
    %77 = tpu.matmul %74, %76, %cst_78 {dimension_numbers = #tpu.dot_dimension_numbers<[1], [0], [0], [1], [0, 0, 1, 1], [], []>} : vector<1x14xf32>, vector<14x2xf32>, vector<1x2xf32> -> vector<1x2xf32>
    %78 = arith.addf %73, %77 : vector<1x2xf32>
    %79 = vector.extract_strided_slice %72 {offsets = [1, 0], sizes = [1, 14], strides = [1, 1]} : vector<4x14xf32> to vector<1x14xf32>
    %c1_79 = arith.constant 1 : index
    %c0_80 = arith.constant 0 : index
    %c0_81 = arith.constant 0 : index
    %80 = vector.load %arg9[%c1_79, %c0_80, %c0_81] : memref<4x14x2xf32, #tpu.memory_space<vmem>>, vector<1x14x2xf32>
    %81 = vector.shape_cast %80 : vector<1x14x2xf32> to vector<14x2xf32>
    %cst_82 = arith.constant dense<0.000000e+00> : vector<1x2xf32>
    %82 = tpu.matmul %79, %81, %cst_82 {dimension_numbers = #tpu.dot_dimension_numbers<[1], [0], [0], [1], [0, 0, 1, 1], [], []>} : vector<1x14xf32>, vector<14x2xf32>, vector<1x2xf32> -> vector<1x2xf32>
    %83 = arith.addf %78, %82 : vector<1x2xf32>
    %84 = vector.extract_strided_slice %72 {offsets = [2, 0], sizes = [1, 14], strides = [1, 1]} : vector<4x14xf32> to vector<1x14xf32>
    %c2_83 = arith.constant 2 : index
    %c0_84 = arith.constant 0 : index
    %c0_85 = arith.constant 0 : index
    %85 = vector.load %arg9[%c2_83, %c0_84, %c0_85] : memref<4x14x2xf32, #tpu.memory_space<vmem>>, vector<1x14x2xf32>
    %86 = vector.shape_cast %85 : vector<1x14x2xf32> to vector<14x2xf32>
    %cst_86 = arith.constant dense<0.000000e+00> : vector<1x2xf32>
    %87 = tpu.matmul %84, %86, %cst_86 {dimension_numbers = #tpu.dot_dimension_numbers<[1], [0], [0], [1], [0, 0, 1, 1], [], []>} : vector<1x14xf32>, vector<14x2xf32>, vector<1x2xf32> -> vector<1x2xf32>
    %88 = arith.addf %83, %87 : vector<1x2xf32>
    %89 = vector.extract_strided_slice %72 {offsets = [3, 0], sizes = [1, 14], strides = [1, 1]} : vector<4x14xf32> to vector<1x14xf32>
    %c3_87 = arith.constant 3 : index
    %c0_88 = arith.constant 0 : index
    %c0_89 = arith.constant 0 : index
    %90 = vector.load %arg9[%c3_87, %c0_88, %c0_89] : memref<4x14x2xf32, #tpu.memory_space<vmem>>, vector<1x14x2xf32>
    %91 = vector.shape_cast %90 : vector<1x14x2xf32> to vector<14x2xf32>
    %cst_90 = arith.constant dense<0.000000e+00> : vector<1x2xf32>
    %92 = tpu.matmul %89, %91, %cst_90 {dimension_numbers = #tpu.dot_dimension_numbers<[1], [0], [0], [1], [0, 0, 1, 1], [], []>} : vector<1x14xf32>, vector<14x2xf32>, vector<1x2xf32> -> vector<1x2xf32>
    %93 = arith.addf %88, %92 : vector<1x2xf32>
    %c0_91 = arith.constant 0 : index
    %c0_92 = arith.constant 0 : index
    %94 = vector.load %arg11[%c0_91, %c0_92] : memref<2x2xf32, #tpu.memory_space<vmem>>, vector<1x2xf32>
    tpu.vector_store %arg11[%c0_91, %c0_92], %93 {strides = array<i32>} : memref<2x2xf32, #tpu.memory_space<vmem>>, vector<1x2xf32>,
    %95 = vector.extract_strided_slice %71 {offsets = [4, 0], sizes = [4, 14], strides = [1, 1]} : vector<8x14xf32> to vector<4x14xf32>
    %c0_93 = arith.constant 0 : index
    %c0_94 = arith.constant 0 : index
    %96 = vector.load %arg10[%c0_93, %c0_94] : memref<1x2xf32, #tpu.memory_space<vmem>>, vector<1x2xf32>
    %97 = vector.extract_strided_slice %95 {offsets = [0, 0], sizes = [1, 14], strides = [1, 1]} : vector<4x14xf32> to vector<1x14xf32>
    %c0_95 = arith.constant 0 : index
    %c0_96 = arith.constant 0 : index
    %c0_97 = arith.constant 0 : index
    %98 = vector.load %arg9[%c0_95, %c0_96, %c0_97] : memref<4x14x2xf32, #tpu.memory_space<vmem>>, vector<1x14x2xf32>
    %99 = vector.shape_cast %98 : vector<1x14x2xf32> to vector<14x2xf32>
    %cst_98 = arith.constant dense<0.000000e+00> : vector<1x2xf32>
    %100 = tpu.matmul %97, %99, %cst_98 {dimension_numbers = #tpu.dot_dimension_numbers<[1], [0], [0], [1], [0, 0, 1, 1], [], []>} : vector<1x14xf32>, vector<14x2xf32>, vector<1x2xf32> -> vector<1x2xf32>
    %101 = arith.addf %96, %100 : vector<1x2xf32>
    %102 = vector.extract_strided_slice %95 {offsets = [1, 0], sizes = [1, 14], strides = [1, 1]} : vector<4x14xf32> to vector<1x14xf32>
    %c1_99 = arith.constant 1 : index
    %c0_100 = arith.constant 0 : index
    %c0_101 = arith.constant 0 : index
    %103 = vector.load %arg9[%c1_99, %c0_100, %c0_101] : memref<4x14x2xf32, #tpu.memory_space<vmem>>, vector<1x14x2xf32>
    %104 = vector.shape_cast %103 : vector<1x14x2xf32> to vector<14x2xf32>
    %cst_102 = arith.constant dense<0.000000e+00> : vector<1x2xf32>
    %105 = tpu.matmul %102, %104, %cst_102 {dimension_numbers = #tpu.dot_dimension_numbers<[1], [0], [0], [1], [0, 0, 1, 1], [], []>} : vector<1x14xf32>, vector<14x2xf32>, vector<1x2xf32> -> vector<1x2xf32>
    %106 = arith.addf %101, %105 : vector<1x2xf32>
    %107 = vector.extract_strided_slice %95 {offsets = [2, 0], sizes = [1, 14], strides = [1, 1]} : vector<4x14xf32> to vector<1x14xf32>
    %c2_103 = arith.constant 2 : index
    %c0_104 = arith.constant 0 : index
    %c0_105 = arith.constant 0 : index
    %108 = vector.load %arg9[%c2_103, %c0_104, %c0_105] : memref<4x14x2xf32, #tpu.memory_space<vmem>>, vector<1x14x2xf32>
    %109 = vector.shape_cast %108 : vector<1x14x2xf32> to vector<14x2xf32>
    %cst_106 = arith.constant dense<0.000000e+00> : vector<1x2xf32>
    %110 = tpu.matmul %107, %109, %cst_106 {dimension_numbers = #tpu.dot_dimension_numbers<[1], [0], [0], [1], [0, 0, 1, 1], [], []>} : vector<1x14xf32>, vector<14x2xf32>, vector<1x2xf32> -> vector<1x2xf32>
    %111 = arith.addf %106, %110 : vector<1x2xf32>
    %112 = vector.extract_strided_slice %95 {offsets = [3, 0], sizes = [1, 14], strides = [1, 1]} : vector<4x14xf32> to vector<1x14xf32>
    %c3_107 = arith.constant 3 : index
    %c0_108 = arith.constant 0 : index
    %c0_109 = arith.constant 0 : index
    %113 = vector.load %arg9[%c3_107, %c0_108, %c0_109] : memref<4x14x2xf32, #tpu.memory_space<vmem>>, vector<1x14x2xf32>
    %114 = vector.shape_cast %113 : vector<1x14x2xf32> to vector<14x2xf32>
    %cst_110 = arith.constant dense<0.000000e+00> : vector<1x2xf32>
    %115 = tpu.matmul %112, %114, %cst_110 {dimension_numbers = #tpu.dot_dimension_numbers<[1], [0], [0], [1], [0, 0, 1, 1], [], []>} : vector<1x14xf32>, vector<14x2xf32>, vector<1x2xf32> -> vector<1x2xf32>
    %116 = arith.addf %111, %115 : vector<1x2xf32>
    %c1_111 = arith.constant 1 : index
    %c0_112 = arith.constant 0 : index
    %117 = vector.load %arg11[%c1_111, %c0_112] : memref<2x2xf32, #tpu.memory_space<vmem>>, vector<1x2xf32>
    tpu.vector_store %arg11[%c1_111, %c0_112], %116 {strides = array<i32>} : memref<2x2xf32, #tpu.memory_space<vmem>>, vector<1x2xf32>,
    return
  }
}

</mosaic_0001>

<llo_original>
// kernel: tile.13
$region0: #{tile.13}
  #allocation0 [shape = 's32[1]{0}', space=sflag, size = 0x4, scoped, tag = 'scoped memory for tile.13']
  %s0 = inlined_call_operand.vmem [shape: f32[4], index: 0, kind: input, shape index: {}]
  %s1 = inlined_call_operand.vmem [shape: f32[2,4], index: 1, kind: output, shape index: {}]
  // Predicated region
  $region2: #{tile.13} parent=0 // pred_check
    _
  $region3: #{tile.13} parent=0 // pred_check_branch
    %3 = sbr.rel (0) target = $region5
  $region4: #{tile.13} parent=0 // pred_region
    _
  $region5: #{tile.13} parent=0 // pred_fallthru
    _
  %v4 = vld [vmem:[%s0] ss:$0 sm:$0xff]
  %5 = vst [vmem:[%s1] sm:$0x3] %v4

// kernel: tile.0
$region0: #{tile.0}
  %s0 = inlined_call_operand.vmem [shape: f32[2,4], index: 0, kind: input, shape index: {}]
  %s1 = inlined_call_operand.vmem [shape: f32[8,1], index: 1, kind: output, shape index: {}]
  $region1: #{tile.0} parent=0
    #allocation0 [shape = 'u8[4096]{0}', space=vmem, size = 0x1000, scoped, tag = 'scoped mem for input reshape']
    %s3 = sshllo.u32 0, 2
    %v4 = vld [vmem:[%s0] sm:%s3]
    %5 = vst [vmem:[#allocation0] sm:%s3] %v4
    %v6 = vld [vmem:[#allocation0] sm:$0x3]
    %vm7 = vcmask 7168
    %8 = vst.msk [vmem:[%s1] ss:$4 sm:$0x3] %vm7, %v6
    %v9 = vld [vmem:[#allocation0] sm:$0x3]
    %10 = vrot.lane.b32.xlu0 %v9, 127
    %v11 = vpop.permute.xlu0 %10
    %vm12 = vcmask 7168
    %s13 = scalar_lea.vmem %s1, 1
    %14 = vst.msk [vmem:[%s13] ss:$4 sm:$0x3] %vm12, %v11
    %v15 = vld [vmem:[#allocation0] sm:$0x3]
    %16 = vrot.lane.b32.xlu0 %v15, 126
    %v17 = vpop.permute.xlu0 %16
    %vm18 = vcmask 7168
    %s19 = scalar_lea.vmem %s1, 2
    %20 = vst.msk [vmem:[%s19] ss:$4 sm:$0x3] %vm18, %v17
    %v21 = vld [vmem:[#allocation0] sm:$0x3]
    %22 = vrot.lane.b32.xlu0 %v21, 125
    %v23 = vpop.permute.xlu0 %22
    %vm24 = vcmask 7168
    %s25 = scalar_lea.vmem %s1, 3
    %26 = vst.msk [vmem:[%s25] ss:$4 sm:$0x3] %vm24, %v23

// kernel: forward.1
$region0: #{forward.1}
  #allocation0 [shape = 'u32[]', space=smem, size = 0x4, offset = 0x4, fixed_abs, tag = 'smem constant byte address 0x4 - core index']
  #allocation1 [shape = 'u32[144,128]{1,0:T(1,128)}', space=vmem, size = 0x12000, scoped, tag = 'internal scratch']
  %s0 = inlined_call_operand.vmem [shape: f32[8,100], index: 0, kind: input, shape index: {}]
  %s1 = inlined_call_operand.hbm [shape: f32[4,100,130], index: 1, kind: input, shape index: {}]
  %s2 = inlined_call_operand.vmem [shape: f32[4,8,8], index: 2, kind: input, shape index: {}]
  %s3 = inlined_call_operand.vmem [shape: f32[8,1], index: 3, kind: input, shape index: {}]
  %s4 = inlined_call_operand.vmem [shape: f32[4,130,26], index: 4, kind: input, shape index: {}]
  %s5 = inlined_call_operand.vmem [shape: f32[26,60], index: 5, kind: input, shape index: {}]
  %s6 = inlined_call_operand.vmem [shape: f32[8,8], index: 6, kind: input, shape index: {}]
  %s7 = inlined_call_operand.vmem [shape: f32[8,1], index: 7, kind: input, shape index: {}]
  %s8 = inlined_call_operand.hbm [shape: f32[4,60,14], index: 8, kind: input, shape index: {}]
  %s9 = inlined_call_operand.vmem [shape: f32[4,14,2], index: 9, kind: input, shape index: {}]
  %s10 = inlined_call_operand.vmem [shape: f32[1,2], index: 10, kind: input, shape index: {}]
  %s11 = inlined_call_operand.hbm [shape: f32[2,2], index: 11, kind: output, shape index: {}]
  %s12 = sld [smem:[#allocation0]]
  $region62: #{forward.1} parent=0
    _
  %s14 = ssub.s32 1, %s12
  %s15 = scalar_select 0, %s14, %s12
  $region1: #{forward.1} parent=0
    #allocation2 [shape = 'u8[425984]{0}', space=vmem, size = 0x68000, scoped, tag = 'input window, operand 1, single buffered']
    #allocation3 [shape = 's32[1]{0}', space=sflag, size = 0x4, scoped, tag = 'scoped memory for forward.1']
    #allocation4 [shape = 's32[1]{0}', space=sflag, size = 0x4, scoped, tag = 'scoped memory for forward.1']
    #allocation5 [shape = 'u8[131072]{0}', space=vmem, size = 0x20000, scoped, tag = 'input window, operand 8, single buffered']
    #allocation6 [shape = 's32[1]{0}', space=sflag, size = 0x4, scoped, tag = 'scoped memory for forward.1']
    #allocation7 [shape = 'u8[1024]{0}', space=vmem, size = 0x400, scoped, tag = 'output window, operand 0, single buffered']
    %16 = vsyncpa [#allocation3], 0
    %17 = vsyncpa [#allocation6], 0
    %18 = vsyncpa [#allocation4], 0
    // Predicated region
    $region2: #{forward.1} parent=1 // pred_check
      _
    $region3: #{forward.1} parent=1 // pred_check_branch
      %20 = sbr.rel (0) target = $region5
    $region4: #{forward.1} parent=1 // pred_region
      _
    $region5: #{forward.1} parent=1 // pred_fallthru
      _
    // Predicated region
    $region6: #{forward.1} parent=1 // pred_check
      _
    $region7: #{forward.1} parent=1 // pred_check_branch
      %22 = sbr.rel (0) target = $region9
    $region8: #{forward.1} parent=1 // pred_region
      %s24 = ssub.s32 13312, 13312
      %25 = vsyncadd [#allocation3], %s24
      %s26 = sshll.u32 [#allocation2], 4
      %s27 = int_to_ptr.vmem [resolvable:$true] %s26
      %32 = dma.hbm_to_vmem [thread:$0]  %s1, 13312, %s27, [#allocation3], 256, 256, 16
    $region9: #{forward.1} parent=1 // pred_fallthru
      _
    // Predicated region
    $region10: #{forward.1} parent=1 // pred_check
      _
    $region11: #{forward.1} parent=1 // pred_check_branch
      %34 = sbr.rel (0) target = $region13
    $region12: #{forward.1} parent=1 // pred_region
      _
    $region13: #{forward.1} parent=1 // pred_fallthru
      _
    // Predicated region
    $region14: #{forward.1} parent=1 // pred_check
      _
    $region15: #{forward.1} parent=1 // pred_check_branch
      %36 = sbr.rel (0) target = $region17
    $region16: #{forward.1} parent=1 // pred_region
      _
    $region17: #{forward.1} parent=1 // pred_fallthru
      _
    // Predicated region
    $region18: #{forward.1} parent=1 // pred_check
      _
    $region19: #{forward.1} parent=1 // pred_check_branch
      %38 = sbr.rel (0) target = $region21
    $region20: #{forward.1} parent=1 // pred_region
      _
    $region21: #{forward.1} parent=1 // pred_fallthru
      _
    // Predicated region
    $region22: #{forward.1} parent=1 // pred_check
      _
    $region23: #{forward.1} parent=1 // pred_check_branch
      %40 = sbr.rel (0) target = $region25
    $region24: #{forward.1} parent=1 // pred_region
      _
    $region25: #{forward.1} parent=1 // pred_fallthru
      _
    // Predicated region
    $region26: #{forward.1} parent=1 // pred_check
      _
    $region27: #{forward.1} parent=1 // pred_check_branch
      %42 = sbr.rel (0) target = $region29
    $region28: #{forward.1} parent=1 // pred_region
      _
    $region29: #{forward.1} parent=1 // pred_fallthru
      _
    // Predicated region
    $region30: #{forward.1} parent=1 // pred_check
      _
    $region31: #{forward.1} parent=1 // pred_check_branch
      %44 = sbr.rel (0) target = $region33
    $region32: #{forward.1} parent=1 // pred_region
      _
    $region33: #{forward.1} parent=1 // pred_fallthru
      _
    // Predicated region
    $region34: #{forward.1} parent=1 // pred_check
      _
    $region35: #{forward.1} parent=1 // pred_check_branch
      %46 = sbr.rel (0) target = $region37
    $region36: #{forward.1} parent=1 // pred_region
      %s48 = ssub.s32 4096, 4096
      %49 = vsyncadd [#allocation6], %s48
      %s50 = sshll.u32 [#allocation5], 4
      %s51 = int_to_ptr.vmem [resolvable:$true] %s50
      %56 = dma.hbm_to_vmem [thread:$0]  %s8, 4096, %s51, [#allocation6], 128, 128, 8
    $region37: #{forward.1} parent=1 // pred_fallthru
      _
    // Predicated region
    $region38: #{forward.1} parent=1 // pred_check
      _
    $region39: #{forward.1} parent=1 // pred_check_branch
      %58 = sbr.rel (0) target = $region41
    $region40: #{forward.1} parent=1 // pred_region
      _
    $region41: #{forward.1} parent=1 // pred_fallthru
      _
    // Predicated region
    $region42: #{forward.1} parent=1 // pred_check
      _
    $region43: #{forward.1} parent=1 // pred_check_branch
      %60 = sbr.rel (0) target = $region45
    $region44: #{forward.1} parent=1 // pred_region
      _
    $region45: #{forward.1} parent=1 // pred_fallthru
      _
    // Predicated region
    $region46: #{forward.1} parent=1 // pred_check
      _
    $region47: #{forward.1} parent=1 // pred_check_branch
      %62 = sbr.rel (0) target = $region49
    $region48: #{forward.1} parent=1 // pred_region
      %63 = dma.done [#allocation3], 13312
    $region49: #{forward.1} parent=1 // pred_fallthru
      _
    // Predicated region
    $region50: #{forward.1} parent=1 // pred_check
      _
    $region51: #{forward.1} parent=1 // pred_check_branch
      %65 = sbr.rel (0) target = $region53
    $region52: #{forward.1} parent=1 // pred_region
      %66 = dma.done [#allocation6], 4096
    $region53: #{forward.1} parent=1 // pred_fallthru
      _
    %v67 = vld [vmem:[%s0] sm:$0xff]
    %v68 = vld [vmem:[#allocation2] sm:$0xff]
    %v69 = vld [vmem:[#allocation2 + $0x8] sm:$0xff]
    %v70 = vld [vmem:[#allocation2 + $0x10] sm:$0xff]
    %v71 = vld [vmem:[#allocation2 + $0x18] sm:$0xff]
    %v72 = vld [vmem:[#allocation2 + $0x20] sm:$0xff]
    %v73 = vld [vmem:[#allocation2 + $0x28] sm:$0xff]
    %v74 = vld [vmem:[#allocation2 + $0x30] sm:$0xff]
    %v75 = vld [vmem:[#allocation2 + $0x38] sm:$0xff]
    %v76 = vld [vmem:[#allocation2 + $0x40] sm:$0xff]
    %v77 = vld [vmem:[#allocation2 + $0x48] sm:$0xff]
    %v78 = vld [vmem:[#allocation2 + $0x50] sm:$0xff]
    %v79 = vld [vmem:[#allocation2 + $0x58] sm:$0xff]
    %v80 = vld [vmem:[#allocation2 + $0x60] sm:$0xff]
    %v81 = vld [vmem:[#allocation2 + $0x68] sm:$0xff]
    %v82 = vld [vmem:[#allocation2 + $0x70] sm:$0xff]
    %v83 = vld [vmem:[#allocation2 + $0x78] sm:$0xff]
    %v84 = vld [vmem:[#allocation2 + $0x80] sm:$0xff]
    %v85 = vld [vmem:[#allocation2 + $0x88] sm:$0xff]
    %v86 = vld [vmem:[#allocation2 + $0x90] sm:$0xff]
    %v87 = vld [vmem:[#allocation2 + $0x98] sm:$0xff]
    %v88 = vld [vmem:[#allocation2 + $0xa0] sm:$0xff]
    %v89 = vld [vmem:[#allocation2 + $0xa8] sm:$0xff]
    %v90 = vld [vmem:[#allocation2 + $0xb0] sm:$0xff]
    %v91 = vld [vmem:[#allocation2 + $0xb8] sm:$0xff]
    %v92 = vld [vmem:[#allocation2 + $0xc0] sm:$0xf]
    %v93 = vld [vmem:[#allocation2 + $0xc8] sm:$0xf]
    %vm94 = vcmask 818176
    %v96 = vsel %vm94, %v67, 0
    %vm98 = vcmask 1043456
    %v100 = vsel %vm98, %v92, 0
    %v103 = vsel %vm98, %v93, 0
    %105 = vmatprep.subr.mxu0 %v69
    %106 = vmatpush1.msra.mxu0 %v68
    %107 = vmatprep.subr.mxu0 %v71
    %108 = vmatpush1.msra.mxu0 %v70
    %109 = vmatprep.subr.mxu0 %v73
    %110 = vmatpush1.msra.mxu0 %v72
    %111 = vmatprep.subr.mxu0 %v75
    %112 = vmatpush1.msra.mxu0 %v74
    %113 = vmatprep.subr.mxu0 %v77
    %114 = vmatpush1.msra.mxu0 %v76
    %115 = vmatprep.subr.mxu0 %v79
    %116 = vmatpush1.msra.mxu0 %v78
    %117 = vmatprep.subr.mxu0 %v81
    %118 = vmatpush1.msra.mxu0 %v80
    %119 = vmatprep.subr.mxu0 %v83
    %120 = vmatpush1.msra.mxu0 %v82
    %121 = vmatprep.subr.mxu0 %v85
    %122 = vmatpush1.msra.mxu0 %v84
    %123 = vmatprep.subr.mxu0 %v87
    %124 = vmatpush1.msra.mxu0 %v86
    %125 = vmatprep.subr.mxu0 %v89
    %126 = vmatpush1.msra.mxu0 %v88
    %127 = vmatprep.subr.mxu0 %v91
    %128 = vmatpush1.msra.mxu0 %v90
    %129 = vmatprep.subr.mxu0 %v103
    %130 = vmatpush1.msra.mxu0 %v100
    %131 = vmatprep.subr.mxu0 0.0
    %132 = vmatpush1.msra.mxu0 0.0
    %133 = vmatprep.subr.mxu0 0.0
    %134 = vmatpush1.msra.mxu0 0.0
    %135 = vmatprep.subr.mxu0 0.0
    %136 = vmatpush1.msra.mxu0 0.0
    %137 = vmatprep.subr.mxu0 0.0
    %138 = vmatpush1.msra.mxu0 0.0
    %139 = vmatprep.subr.mxu0 0.0
    %140 = vmatpush1.msra.mxu0 0.0
    %141 = vmatprep.subr.mxu0 0.0
    %142 = vmatpush1.msra.mxu0 0.0
    %143 = vmatprep.subr.mxu0 0.0
    %144 = vmatpush1.msra.mxu0 0.0
    %145 = vmatprep.subr.mxu0 0.0
    %146 = vmatpush1.msra.mxu0 0.0
    %147 = vmatprep.subr.mxu0 0.0
    %148 = vmatpush1.msra.mxu0 0.0
    %149 = vmatprep.subr.mxu0 0.0
    %150 = vmatpush1.msra.mxu0 0.0
    %151 = vmatprep.subr.mxu0 0.0
    %152 = vmatpush1.msra.mxu0 0.0
    %153 = vmatprep.subr.mxu0 0.0
    %154 = vmatpush1.msra.mxu0 0.0
    %155 = vmatprep.subr.mxu0 0.0
    %156 = vmatpush1.msra.mxu0 0.0
    %157 = vmatprep.subr.mxu0 0.0
    %158 = vmatpush1.msra.mxu0 0.0
    %159 = vmatprep.subr.mxu0 0.0
    %160 = vmatpush1.msra.mxu0 0.0
    %161 = vmatprep.subr.mxu0 0.0
    %162 = vmatpush1.msra.mxu0 0.0
    %163 = vmatprep.subr.mxu0 0.0
    %164 = vmatpush1.msra.mxu0 0.0
    %165 = vmatprep.subr.mxu0 0.0
    %166 = vmatpush1.msra.mxu0 0.0
    %167 = vmatprep.subr.mxu0 0.0
    %168 = vmatpush1.msra.mxu0 0.0
    %169 = vmatprep.mubr.f32.mxu0 0.0
    %170 = vmatmul.mubr.f32.gmra.mrb[0].mxu0 %v96
    %v171 = vpop.f32.mrb[0].mxu0
    %v172 = vadd.f32 0.0, %v171
    %v173 = vpop.f32.mrb[0].mxu0
    %v174 = vadd.f32 0.0, %v173
    %175 = vdwg.mxu0
    %v176 = vld [vmem:[%s2] sm:$0xff]
    %s177 = scalar_lea.vmem [#allocation2], 208
    %v178 = vld [vmem:[%s177] sm:$0xff]
    %v179 = vld [vmem:[%s177 + $0x8] sm:$0xff]
    %v180 = vld [vmem:[%s177 + $0x10] sm:$0xff]
    %v181 = vld [vmem:[%s177 + $0x18] sm:$0xff]
    %v182 = vld [vmem:[%s177 + $0x20] sm:$0xff]
    %v183 = vld [vmem:[%s177 + $0x28] sm:$0xff]
    %v184 = vld [vmem:[%s177 + $0x30] sm:$0xff]
    %v185 = vld [vmem:[%s177 + $0x38] sm:$0xff]
    %v186 = vld [vmem:[%s177 + $0x40] sm:$0xff]
    %v187 = vld [vmem:[%s177 + $0x48] sm:$0xff]
    %v188 = vld [vmem:[%s177 + $0x50] sm:$0xff]
    %v189 = vld [vmem:[%s177 + $0x58] sm:$0xff]
    %v190 = vld [vmem:[%s177 + $0x60] sm:$0xff]
    %v191 = vld [vmem:[%s177 + $0x68] sm:$0xff]
    %v192 = vld [vmem:[%s177 + $0x70] sm:$0xff]
    %v193 = vld [vmem:[%s177 + $0x78] sm:$0xff]
    %v194 = vld [vmem:[%s177 + $0x80] sm:$0xff]
    %v195 = vld [vmem:[%s177 + $0x88] sm:$0xff]
    %v196 = vld [vmem:[%s177 + $0x90] sm:$0xff]
    %v197 = vld [vmem:[%s177 + $0x98] sm:$0xff]
    %v198 = vld [vmem:[%s177 + $0xa0] sm:$0xff]
    %v199 = vld [vmem:[%s177 + $0xa8] sm:$0xff]
    %v200 = vld [vmem:[%s177 + $0xb0] sm:$0xff]
    %v201 = vld [vmem:[%s177 + $0xb8] sm:$0xff]
    %v202 = vld [vmem:[%s177 + $0xc0] sm:$0xf]
    %v203 = vld [vmem:[%s177 + $0xc8] sm:$0xf]
    %v205 = vsel %vm98, %v202, 0
    %v208 = vsel %vm98, %v203, 0
    %210 = vmatprep.subr.mxu0 %v179
    %211 = vmatpush1.msra.mxu0 %v178
    %212 = vmatprep.subr.mxu0 %v181
    %213 = vmatpush1.msra.mxu0 %v180
    %214 = vmatprep.subr.mxu0 %v183
    %215 = vmatpush1.msra.mxu0 %v182
    %216 = vmatprep.subr.mxu0 %v185
    %217 = vmatpush1.msra.mxu0 %v184
    %218 = vmatprep.subr.mxu0 %v187
    %219 = vmatpush1.msra.mxu0 %v186
    %220 = vmatprep.subr.mxu0 %v189
    %221 = vmatpush1.msra.mxu0 %v188
    %222 = vmatprep.subr.mxu0 %v191
    %223 = vmatpush1.msra.mxu0 %v190
    %224 = vmatprep.subr.mxu0 %v193
    %225 = vmatpush1.msra.mxu0 %v192
    %226 = vmatprep.subr.mxu0 %v195
    %227 = vmatpush1.msra.mxu0 %v194
    %228 = vmatprep.subr.mxu0 %v197
    %229 = vmatpush1.msra.mxu0 %v196
    %230 = vmatprep.subr.mxu0 %v199
    %231 = vmatpush1.msra.mxu0 %v198
    %232 = vmatprep.subr.mxu0 %v201
    %233 = vmatpush1.msra.mxu0 %v200
    %234 = vmatprep.subr.mxu0 %v208
    %235 = vmatpush1.msra.mxu0 %v205
    %236 = vmatprep.subr.mxu0 0.0
    %237 = vmatpush1.msra.mxu0 0.0
    %238 = vmatprep.subr.mxu0 0.0
    %239 = vmatpush1.msra.mxu0 0.0
    %240 = vmatprep.subr.mxu0 0.0
    %241 = vmatpush1.msra.mxu0 0.0
    %242 = vmatprep.subr.mxu0 0.0
    %243 = vmatpush1.msra.mxu0 0.0
    %244 = vmatprep.subr.mxu0 0.0
    %245 = vmatpush1.msra.mxu0 0.0
    %246 = vmatprep.subr.mxu0 0.0
    %247 = vmatpush1.msra.mxu0 0.0
    %248 = vmatprep.subr.mxu0 0.0
    %249 = vmatpush1.msra.mxu0 0.0
    %250 = vmatprep.subr.mxu0 0.0
    %251 = vmatpush1.msra.mxu0 0.0
    %252 = vmatprep.subr.mxu0 0.0
    %253 = vmatpush1.msra.mxu0 0.0
    %254 = vmatprep.subr.mxu0 0.0
    %255 = vmatpush1.msra.mxu0 0.0
    %256 = vmatprep.subr.mxu0 0.0
    %257 = vmatpush1.msra.mxu0 0.0
    %258 = vmatprep.subr.mxu0 0.0
    %259 = vmatpush1.msra.mxu0 0.0
    %260 = vmatprep.subr.mxu0 0.0
    %261 = vmatpush1.msra.mxu0 0.0
    %262 = vmatprep.subr.mxu0 0.0
    %263 = vmatpush1.msra.mxu0 0.0
    %264 = vmatprep.subr.mxu0 0.0
    %265 = vmatpush1.msra.mxu0 0.0
    %266 = vmatprep.subr.mxu0 0.0
    %267 = vmatpush1.msra.mxu0 0.0
    %268 = vmatprep.subr.mxu0 0.0
    %269 = vmatpush1.msra.mxu0 0.0
    %270 = vmatprep.subr.mxu0 0.0
    %271 = vmatpush1.msra.mxu0 0.0
    %272 = vmatprep.subr.mxu0 0.0
    %273 = vmatpush1.msra.mxu0 0.0
    %274 = vmatprep.mubr.f32.mxu0 0.0
    %275 = vmatmul.mubr.f32.gmra.mrb[0].mxu0 %v96
    %v276 = vpop.f32.mrb[0].mxu0
    %v277 = vadd.f32 0.0, %v276
    %v278 = vpop.f32.mrb[0].mxu0
    %v279 = vadd.f32 0.0, %v278
    %280 = vdwg.mxu0
    %s281 = scalar_lea.vmem %s2, 8
    %v282 = vld [vmem:[%s281] sm:$0xff]
    %vm283 = vcmask 64512
    %v285 = vsel %vm283, %v282, 0
    %287 = vmatprep.subr.mxu0 %v279
    %288 = vmatpush1.msra.mxu0 %v277
    %289 = vmatprep.subr.mxu0 0.0
    %290 = vmatpush1.msra.mxu0 0.0
    %291 = vmatprep.subr.mxu0 0.0
    %292 = vmatpush1.msra.mxu0 0.0
    %293 = vmatprep.subr.mxu0 0.0
    %294 = vmatpush1.msra.mxu0 0.0
    %295 = vmatprep.subr.mxu0 0.0
    %296 = vmatpush1.msra.mxu0 0.0
    %297 = vmatprep.subr.mxu0 0.0
    %298 = vmatpush1.msra.mxu0 0.0
    %299 = vmatprep.subr.mxu0 0.0
    %300 = vmatpush1.msra.mxu0 0.0
    %301 = vmatprep.subr.mxu0 0.0
    %302 = vmatpush1.msra.mxu0 0.0
    %303 = vmatprep.subr.mxu0 0.0
    %304 = vmatpush1.msra.mxu0 0.0
    %305 = vmatprep.subr.mxu0 0.0
    %306 = vmatpush1.msra.mxu0 0.0
    %307 = vmatprep.subr.mxu0 0.0
    %308 = vmatpush1.msra.mxu0 0.0
    %309 = vmatprep.subr.mxu0 0.0
    %310 = vmatpush1.msra.mxu0 0.0
    %311 = vmatprep.subr.mxu0 0.0
    %312 = vmatpush1.msra.mxu0 0.0
    %313 = vmatprep.subr.mxu0 0.0
    %314 = vmatpush1.msra.mxu0 0.0
    %315 = vmatprep.subr.mxu0 0.0
    %316 = vmatpush1.msra.mxu0 0.0
    %317 = vmatprep.subr.mxu0 0.0
    %318 = vmatpush1.msra.mxu0 0.0
    %319 = vmatprep.subr.mxu0 0.0
    %320 = vmatpush1.msra.mxu0 0.0
    %321 = vmatprep.subr.mxu0 0.0
    %322 = vmatpush1.msra.mxu0 0.0
    %323 = vmatprep.subr.mxu0 0.0
    %324 = vmatpush1.msra.mxu0 0.0
    %325 = vmatprep.subr.mxu0 0.0
    %326 = vmatpush1.msra.mxu0 0.0
    %327 = vmatprep.subr.mxu0 0.0
    %328 = vmatpush1.msra.mxu0 0.0
    %329 = vmatprep.subr.mxu0 0.0
    %330 = vmatpush1.msra.mxu0 0.0
    %331 = vmatprep.subr.mxu0 0.0
    %332 = vmatpush1.msra.mxu0 0.0
    %333 = vmatprep.subr.mxu0 0.0
    %334 = vmatpush1.msra.mxu0 0.0
    %335 = vmatprep.subr.mxu0 0.0
    %336 = vmatpush1.msra.mxu0 0.0
    %337 = vmatprep.subr.mxu0 0.0
    %338 = vmatpush1.msra.mxu0 0.0
    %339 = vmatprep.subr.mxu0 0.0
    %340 = vmatpush1.msra.mxu0 0.0
    %341 = vmatprep.subr.mxu0 0.0
    %342 = vmatpush1.msra.mxu0 0.0
    %343 = vmatprep.subr.mxu0 0.0
    %344 = vmatpush1.msra.mxu0 0.0
    %345 = vmatprep.subr.mxu0 0.0
    %346 = vmatpush1.msra.mxu0 0.0
    %347 = vmatprep.subr.mxu0 0.0
    %348 = vmatpush1.msra.mxu0 0.0
    %349 = vmatprep.subr.mxu0 0.0
    %350 = vmatpush1.msra.mxu0 0.0
    %351 = vmatprep.mubr.f32.mxu0 0.0
    %352 = vmatmul.mubr.f32.gmra.mrb[0].mxu0 %v285
    %v353 = vpop.f32.mrb[0].mxu0
    %v354 = vadd.f32 0.0, %v353
    %v355 = vpop.f32.mrb[0].mxu0
    %v356 = vadd.f32 0.0, %v355
    %357 = vdwg.mxu0
    %v359 = vsel %vm283, %v176, 0
    %361 = vmatprep.subr.mxu0 %v174
    %362 = vmatpush1.msra.mxu0 %v172
    %363 = vmatprep.subr.mxu0 0.0
    %364 = vmatpush1.msra.mxu0 0.0
    %365 = vmatprep.subr.mxu0 0.0
    %366 = vmatpush1.msra.mxu0 0.0
    %367 = vmatprep.subr.mxu0 0.0
    %368 = vmatpush1.msra.mxu0 0.0
    %369 = vmatprep.subr.mxu0 0.0
    %370 = vmatpush1.msra.mxu0 0.0
    %371 = vmatprep.subr.mxu0 0.0
    %372 = vmatpush1.msra.mxu0 0.0
    %373 = vmatprep.subr.mxu0 0.0
    %374 = vmatpush1.msra.mxu0 0.0
    %375 = vmatprep.subr.mxu0 0.0
    %376 = vmatpush1.msra.mxu0 0.0
    %377 = vmatprep.subr.mxu0 0.0
    %378 = vmatpush1.msra.mxu0 0.0
    %379 = vmatprep.subr.mxu0 0.0
    %380 = vmatpush1.msra.mxu0 0.0
    %381 = vmatprep.subr.mxu0 0.0
    %382 = vmatpush1.msra.mxu0 0.0
    %383 = vmatprep.subr.mxu0 0.0
    %384 = vmatpush1.msra.mxu0 0.0
    %385 = vmatprep.subr.mxu0 0.0
    %386 = vmatpush1.msra.mxu0 0.0
    %387 = vmatprep.subr.mxu0 0.0
    %388 = vmatpush1.msra.mxu0 0.0
    %389 = vmatprep.subr.mxu0 0.0
    %390 = vmatpush1.msra.mxu0 0.0
    %391 = vmatprep.subr.mxu0 0.0
    %392 = vmatpush1.msra.mxu0 0.0
    %393 = vmatprep.subr.mxu0 0.0
    %394 = vmatpush1.msra.mxu0 0.0
    %395 = vmatprep.subr.mxu0 0.0
    %396 = vmatpush1.msra.mxu0 0.0
    %397 = vmatprep.subr.mxu0 0.0
    %398 = vmatpush1.msra.mxu0 0.0
    %399 = vmatprep.subr.mxu0 0.0
    %400 = vmatpush1.msra.mxu0 0.0
    %401 = vmatprep.subr.mxu0 0.0
    %402 = vmatpush1.msra.mxu0 0.0
    %403 = vmatprep.subr.mxu0 0.0
    %404 = vmatpush1.msra.mxu0 0.0
    %405 = vmatprep.subr.mxu0 0.0
    %406 = vmatpush1.msra.mxu0 0.0
    %407 = vmatprep.subr.mxu0 0.0
    %408 = vmatpush1.msra.mxu0 0.0
    %409 = vmatprep.subr.mxu0 0.0
    %410 = vmatpush1.msra.mxu0 0.0
    %411 = vmatprep.subr.mxu0 0.0
    %412 = vmatpush1.msra.mxu0 0.0
    %413 = vmatprep.subr.mxu0 0.0
    %414 = vmatpush1.msra.mxu0 0.0
    %415 = vmatprep.subr.mxu0 0.0
    %416 = vmatpush1.msra.mxu0 0.0
    %417 = vmatprep.subr.mxu0 0.0
    %418 = vmatpush1.msra.mxu0 0.0
    %419 = vmatprep.subr.mxu0 0.0
    %420 = vmatpush1.msra.mxu0 0.0
    %421 = vmatprep.subr.mxu0 0.0
    %422 = vmatpush1.msra.mxu0 0.0
    %423 = vmatprep.subr.mxu0 0.0
    %424 = vmatpush1.msra.mxu0 0.0
    %425 = vmatprep.mubr.f32.mxu0 0.0
    %426 = vmatmul.mubr.f32.gmra.mrb[0].mxu0 %v359
    %v427 = vpop.f32.mrb[0].mxu0
    %v428 = vadd.f32 %v354, %v427
    %v429 = vpop.f32.mrb[0].mxu0
    %v430 = vadd.f32 %v356, %v429
    %431 = vdwg.mxu0
    %s432 = scalar_lea.vmem [#allocation2], 416
    %v433 = vld [vmem:[%s432] sm:$0xff]
    %v434 = vld [vmem:[%s432 + $0x8] sm:$0xff]
    %v435 = vld [vmem:[%s432 + $0x10] sm:$0xff]
    %v436 = vld [vmem:[%s432 + $0x18] sm:$0xff]
    %v437 = vld [vmem:[%s432 + $0x20] sm:$0xff]
    %v438 = vld [vmem:[%s432 + $0x28] sm:$0xff]
    %v439 = vld [vmem:[%s432 + $0x30] sm:$0xff]
    %v440 = vld [vmem:[%s432 + $0x38] sm:$0xff]
    %v441 = vld [vmem:[%s432 + $0x40] sm:$0xff]
    %v442 = vld [vmem:[%s432 + $0x48] sm:$0xff]
    %v443 = vld [vmem:[%s432 + $0x50] sm:$0xff]
    %v444 = vld [vmem:[%s432 + $0x58] sm:$0xff]
    %v445 = vld [vmem:[%s432 + $0x60] sm:$0xff]
    %v446 = vld [vmem:[%s432 + $0x68] sm:$0xff]
    %v447 = vld [vmem:[%s432 + $0x70] sm:$0xff]
    %v448 = vld [vmem:[%s432 + $0x78] sm:$0xff]
    %v449 = vld [vmem:[%s432 + $0x80] sm:$0xff]
    %v450 = vld [vmem:[%s432 + $0x88] sm:$0xff]
    %v451 = vld [vmem:[%s432 + $0x90] sm:$0xff]
    %v452 = vld [vmem:[%s432 + $0x98] sm:$0xff]
    %v453 = vld [vmem:[%s432 + $0xa0] sm:$0xff]
    %v454 = vld [vmem:[%s432 + $0xa8] sm:$0xff]
    %v455 = vld [vmem:[%s432 + $0xb0] sm:$0xff]
    %v456 = vld [vmem:[%s432 + $0xb8] sm:$0xff]
    %v457 = vld [vmem:[%s432 + $0xc0] sm:$0xf]
    %v458 = vld [vmem:[%s432 + $0xc8] sm:$0xf]
    %v460 = vsel %vm98, %v457, 0
    %v463 = vsel %vm98, %v458, 0
    %465 = vmatprep.subr.mxu0 %v434
    %466 = vmatpush1.msra.mxu0 %v433
    %467 = vmatprep.subr.mxu0 %v436
    %468 = vmatpush1.msra.mxu0 %v435
    %469 = vmatprep.subr.mxu0 %v438
    %470 = vmatpush1.msra.mxu0 %v437
    %471 = vmatprep.subr.mxu0 %v440
    %472 = vmatpush1.msra.mxu0 %v439
    %473 = vmatprep.subr.mxu0 %v442
    %474 = vmatpush1.msra.mxu0 %v441
    %475 = vmatprep.subr.mxu0 %v444
    %476 = vmatpush1.msra.mxu0 %v443
    %477 = vmatprep.subr.mxu0 %v446
    %478 = vmatpush1.msra.mxu0 %v445
    %479 = vmatprep.subr.mxu0 %v448
    %480 = vmatpush1.msra.mxu0 %v447
    %481 = vmatprep.subr.mxu0 %v450
    %482 = vmatpush1.msra.mxu0 %v449
    %483 = vmatprep.subr.mxu0 %v452
    %484 = vmatpush1.msra.mxu0 %v451
    %485 = vmatprep.subr.mxu0 %v454
    %486 = vmatpush1.msra.mxu0 %v453
    %487 = vmatprep.subr.mxu0 %v456
    %488 = vmatpush1.msra.mxu0 %v455
    %489 = vmatprep.subr.mxu0 %v463
    %490 = vmatpush1.msra.mxu0 %v460
    %491 = vmatprep.subr.mxu0 0.0
    %492 = vmatpush1.msra.mxu0 0.0
    %493 = vmatprep.subr.mxu0 0.0
    %494 = vmatpush1.msra.mxu0 0.0
    %495 = vmatprep.subr.mxu0 0.0
    %496 = vmatpush1.msra.mxu0 0.0
    %497 = vmatprep.subr.mxu0 0.0
    %498 = vmatpush1.msra.mxu0 0.0
    %499 = vmatprep.subr.mxu0 0.0
    %500 = vmatpush1.msra.mxu0 0.0
    %501 = vmatprep.subr.mxu0 0.0
    %502 = vmatpush1.msra.mxu0 0.0
    %503 = vmatprep.subr.mxu0 0.0
    %504 = vmatpush1.msra.mxu0 0.0
    %505 = vmatprep.subr.mxu0 0.0
    %506 = vmatpush1.msra.mxu0 0.0
    %507 = vmatprep.subr.mxu0 0.0
    %508 = vmatpush1.msra.mxu0 0.0
    %509 = vmatprep.subr.mxu0 0.0
    %510 = vmatpush1.msra.mxu0 0.0
    %511 = vmatprep.subr.mxu0 0.0
    %512 = vmatpush1.msra.mxu0 0.0
    %513 = vmatprep.subr.mxu0 0.0
    %514 = vmatpush1.msra.mxu0 0.0
    %515 = vmatprep.subr.mxu0 0.0
    %516 = vmatpush1.msra.mxu0 0.0
    %517 = vmatprep.subr.mxu0 0.0
    %518 = vmatpush1.msra.mxu0 0.0
    %519 = vmatprep.subr.mxu0 0.0
    %520 = vmatpush1.msra.mxu0 0.0
    %521 = vmatprep.subr.mxu0 0.0
    %522 = vmatpush1.msra.mxu0 0.0
    %523 = vmatprep.subr.mxu0 0.0
    %524 = vmatpush1.msra.mxu0 0.0
    %525 = vmatprep.subr.mxu0 0.0
    %526 = vmatpush1.msra.mxu0 0.0
    %527 = vmatprep.subr.mxu0 0.0
    %528 = vmatpush1.msra.mxu0 0.0
    %529 = vmatprep.mubr.f32.mxu0 0.0
    %530 = vmatmul.mubr.f32.gmra.mrb[0].mxu0 %v96
    %v531 = vpop.f32.mrb[0].mxu0
    %v532 = vadd.f32 0.0, %v531
    %v533 = vpop.f32.mrb[0].mxu0
    %v534 = vadd.f32 0.0, %v533
    %535 = vdwg.mxu0
    %s536 = scalar_lea.vmem %s2, 16
    %v537 = vld [vmem:[%s536] sm:$0xff]
    %v539 = vsel %vm283, %v537, 0
    %541 = vmatprep.subr.mxu0 %v534
    %542 = vmatpush1.msra.mxu0 %v532
    %543 = vmatprep.subr.mxu0 0.0
    %544 = vmatpush1.msra.mxu0 0.0
    %545 = vmatprep.subr.mxu0 0.0
    %546 = vmatpush1.msra.mxu0 0.0
    %547 = vmatprep.subr.mxu0 0.0
    %548 = vmatpush1.msra.mxu0 0.0
    %549 = vmatprep.subr.mxu0 0.0
    %550 = vmatpush1.msra.mxu0 0.0
    %551 = vmatprep.subr.mxu0 0.0
    %552 = vmatpush1.msra.mxu0 0.0
    %553 = vmatprep.subr.mxu0 0.0
    %554 = vmatpush1.msra.mxu0 0.0
    %555 = vmatprep.subr.mxu0 0.0
    %556 = vmatpush1.msra.mxu0 0.0
    %557 = vmatprep.subr.mxu0 0.0
    %558 = vmatpush1.msra.mxu0 0.0
    %559 = vmatprep.subr.mxu0 0.0
    %560 = vmatpush1.msra.mxu0 0.0
    %561 = vmatprep.subr.mxu0 0.0
    %562 = vmatpush1.msra.mxu0 0.0
    %563 = vmatprep.subr.mxu0 0.0
    %564 = vmatpush1.msra.mxu0 0.0
    %565 = vmatprep.subr.mxu0 0.0
    %566 = vmatpush1.msra.mxu0 0.0
    %567 = vmatprep.subr.mxu0 0.0
    %568 = vmatpush1.msra.mxu0 0.0
    %569 = vmatprep.subr.mxu0 0.0
    %570 = vmatpush1.msra.mxu0 0.0
    %571 = vmatprep.subr.mxu0 0.0
    %572 = vmatpush1.msra.mxu0 0.0
    %573 = vmatprep.subr.mxu0 0.0
    %574 = vmatpush1.msra.mxu0 0.0
    %575 = vmatprep.subr.mxu0 0.0
    %576 = vmatpush1.msra.mxu0 0.0
    %577 = vmatprep.subr.mxu0 0.0
    %578 = vmatpush1.msra.mxu0 0.0
    %579 = vmatprep.subr.mxu0 0.0
    %580 = vmatpush1.msra.mxu0 0.0
    %581 = vmatprep.subr.mxu0 0.0
    %582 = vmatpush1.msra.mxu0 0.0
    %583 = vmatprep.subr.mxu0 0.0
    %584 = vmatpush1.msra.mxu0 0.0
    %585 = vmatprep.subr.mxu0 0.0
    %586 = vmatpush1.msra.mxu0 0.0
    %587 = vmatprep.subr.mxu0 0.0
    %588 = vmatpush1.msra.mxu0 0.0
    %589 = vmatprep.subr.mxu0 0.0
    %590 = vmatpush1.msra.mxu0 0.0
    %591 = vmatprep.subr.mxu0 0.0
    %592 = vmatpush1.msra.mxu0 0.0
    %593 = vmatprep.subr.mxu0 0.0
    %594 = vmatpush1.msra.mxu0 0.0
    %595 = vmatprep.subr.mxu0 0.0
    %596 = vmatpush1.msra.mxu0 0.0
    %597 = vmatprep.subr.mxu0 0.0
    %598 = vmatpush1.msra.mxu0 0.0
    %599 = vmatprep.subr.mxu0 0.0
    %600 = vmatpush1.msra.mxu0 0.0
    %601 = vmatprep.subr.mxu0 0.0
    %602 = vmatpush1.msra.mxu0 0.0
    %603 = vmatprep.subr.mxu0 0.0
    %604 = vmatpush1.msra.mxu0 0.0
    %605 = vmatprep.mubr.f32.mxu0 0.0
    %606 = vmatmul.mubr.f32.gmra.mrb[0].mxu0 %v539
    %v607 = vpop.f32.mrb[0].mxu0
    %v608 = vadd.f32 0.0, %v607
    %v609 = vpop.f32.mrb[0].mxu0
    %v610 = vadd.f32 0.0, %v609
    %611 = vdwg.mxu0
    %v612 = vadd.f32 %v428, %v608
    %v613 = vadd.f32 %v430, %v610
    %s614 = scalar_lea.vmem [#allocation2], 624
    %v615 = vld [vmem:[%s614] sm:$0xff]
    %v616 = vld [vmem:[%s614 + $0x8] sm:$0xff]
    %v617 = vld [vmem:[%s614 + $0x10] sm:$0xff]
    %v618 = vld [vmem:[%s614 + $0x18] sm:$0xff]
    %v619 = vld [vmem:[%s614 + $0x20] sm:$0xff]
    %v620 = vld [vmem:[%s614 + $0x28] sm:$0xff]
    %v621 = vld [vmem:[%s614 + $0x30] sm:$0xff]
    %v622 = vld [vmem:[%s614 + $0x38] sm:$0xff]
    %v623 = vld [vmem:[%s614 + $0x40] sm:$0xff]
    %v624 = vld [vmem:[%s614 + $0x48] sm:$0xff]
    %v625 = vld [vmem:[%s614 + $0x50] sm:$0xff]
    %v626 = vld [vmem:[%s614 + $0x58] sm:$0xff]
    %v627 = vld [vmem:[%s614 + $0x60] sm:$0xff]
    %v628 = vld [vmem:[%s614 + $0x68] sm:$0xff]
    %v629 = vld [vmem:[%s614 + $0x70] sm:$0xff]
    %v630 = vld [vmem:[%s614 + $0x78] sm:$0xff]
    %v631 = vld [vmem:[%s614 + $0x80] sm:$0xff]
    %v632 = vld [vmem:[%s614 + $0x88] sm:$0xff]
    %v633 = vld [vmem:[%s614 + $0x90] sm:$0xff]
    %v634 = vld [vmem:[%s614 + $0x98] sm:$0xff]
    %v635 = vld [vmem:[%s614 + $0xa0] sm:$0xff]
    %v636 = vld [vmem:[%s614 + $0xa8] sm:$0xff]
    %v637 = vld [vmem:[%s614 + $0xb0] sm:$0xff]
    %v638 = vld [vmem:[%s614 + $0xb8] sm:$0xff]
    %v639 = vld [vmem:[%s614 + $0xc0] sm:$0xf]
    %v640 = vld [vmem:[%s614 + $0xc8] sm:$0xf]
    %v642 = vsel %vm98, %v639, 0
    %v645 = vsel %vm98, %v640, 0
    %647 = vmatprep.subr.mxu0 %v616
    %648 = vmatpush1.msra.mxu0 %v615
    %649 = vmatprep.subr.mxu0 %v618
    %650 = vmatpush1.msra.mxu0 %v617
    %651 = vmatprep.subr.mxu0 %v620
    %652 = vmatpush1.msra.mxu0 %v619
    %653 = vmatprep.subr.mxu0 %v622
    %654 = vmatpush1.msra.mxu0 %v621
    %655 = vmatprep.subr.mxu0 %v624
    %656 = vmatpush1.msra.mxu0 %v623
    %657 = vmatprep.subr.mxu0 %v626
    %658 = vmatpush1.msra.mxu0 %v625
    %659 = vmatprep.subr.mxu0 %v628
    %660 = vmatpush1.msra.mxu0 %v627
    %661 = vmatprep.subr.mxu0 %v630
    %662 = vmatpush1.msra.mxu0 %v629
    %663 = vmatprep.subr.mxu0 %v632
    %664 = vmatpush1.msra.mxu0 %v631
    %665 = vmatprep.subr.mxu0 %v634
    %666 = vmatpush1.msra.mxu0 %v633
    %667 = vmatprep.subr.mxu0 %v636
    %668 = vmatpush1.msra.mxu0 %v635
    %669 = vmatprep.subr.mxu0 %v638
    %670 = vmatpush1.msra.mxu0 %v637
    %671 = vmatprep.subr.mxu0 %v645
    %672 = vmatpush1.msra.mxu0 %v642
    %673 = vmatprep.subr.mxu0 0.0
    %674 = vmatpush1.msra.mxu0 0.0
    %675 = vmatprep.subr.mxu0 0.0
    %676 = vmatpush1.msra.mxu0 0.0
    %677 = vmatprep.subr.mxu0 0.0
    %678 = vmatpush1.msra.mxu0 0.0
    %679 = vmatprep.subr.mxu0 0.0
    %680 = vmatpush1.msra.mxu0 0.0
    %681 = vmatprep.subr.mxu0 0.0
    %682 = vmatpush1.msra.mxu0 0.0
    %683 = vmatprep.subr.mxu0 0.0
    %684 = vmatpush1.msra.mxu0 0.0
    %685 = vmatprep.subr.mxu0 0.0
    %686 = vmatpush1.msra.mxu0 0.0
    %687 = vmatprep.subr.mxu0 0.0
    %688 = vmatpush1.msra.mxu0 0.0
    %689 = vmatprep.subr.mxu0 0.0
    %690 = vmatpush1.msra.mxu0 0.0
    %691 = vmatprep.subr.mxu0 0.0
    %692 = vmatpush1.msra.mxu0 0.0
    %693 = vmatprep.subr.mxu0 0.0
    %694 = vmatpush1.msra.mxu0 0.0
    %695 = vmatprep.subr.mxu0 0.0
    %696 = vmatpush1.msra.mxu0 0.0
    %697 = vmatprep.subr.mxu0 0.0
    %698 = vmatpush1.msra.mxu0 0.0
    %699 = vmatprep.subr.mxu0 0.0
    %700 = vmatpush1.msra.mxu0 0.0
    %701 = vmatprep.subr.mxu0 0.0
    %702 = vmatpush1.msra.mxu0 0.0
    %703 = vmatprep.subr.mxu0 0.0
    %704 = vmatpush1.msra.mxu0 0.0
    %705 = vmatprep.subr.mxu0 0.0
    %706 = vmatpush1.msra.mxu0 0.0
    %707 = vmatprep.subr.mxu0 0.0
    %708 = vmatpush1.msra.mxu0 0.0
    %709 = vmatprep.subr.mxu0 0.0
    %710 = vmatpush1.msra.mxu0 0.0
    %711 = vmatprep.mubr.f32.mxu0 0.0
    %712 = vmatmul.mubr.f32.gmra.mrb[0].mxu0 %v96
    %v713 = vpop.f32.mrb[0].mxu0
    %v714 = vadd.f32 0.0, %v713
    %v715 = vpop.f32.mrb[0].mxu0
    %v716 = vadd.f32 0.0, %v715
    %717 = vdwg.mxu0
    %s718 = scalar_lea.vmem %s2, 24
    %v719 = vld [vmem:[%s718] sm:$0xff]
    %v721 = vsel %vm283, %v719, 0
    %723 = vmatprep.subr.mxu0 %v716
    %724 = vmatpush1.msra.mxu0 %v714
    %725 = vmatprep.subr.mxu0 0.0
    %726 = vmatpush1.msra.mxu0 0.0
    %727 = vmatprep.subr.mxu0 0.0
    %728 = vmatpush1.msra.mxu0 0.0
    %729 = vmatprep.subr.mxu0 0.0
    %730 = vmatpush1.msra.mxu0 0.0
    %731 = vmatprep.subr.mxu0 0.0
    %732 = vmatpush1.msra.mxu0 0.0
    %733 = vmatprep.subr.mxu0 0.0
    %734 = vmatpush1.msra.mxu0 0.0
    %735 = vmatprep.subr.mxu0 0.0
    %736 = vmatpush1.msra.mxu0 0.0
    %737 = vmatprep.subr.mxu0 0.0
    %738 = vmatpush1.msra.mxu0 0.0
    %739 = vmatprep.subr.mxu0 0.0
    %740 = vmatpush1.msra.mxu0 0.0
    %741 = vmatprep.subr.mxu0 0.0
    %742 = vmatpush1.msra.mxu0 0.0
    %743 = vmatprep.subr.mxu0 0.0
    %744 = vmatpush1.msra.mxu0 0.0
    %745 = vmatprep.subr.mxu0 0.0
    %746 = vmatpush1.msra.mxu0 0.0
    %747 = vmatprep.subr.mxu0 0.0
    %748 = vmatpush1.msra.mxu0 0.0
    %749 = vmatprep.subr.mxu0 0.0
    %750 = vmatpush1.msra.mxu0 0.0
    %751 = vmatprep.subr.mxu0 0.0
    %752 = vmatpush1.msra.mxu0 0.0
    %753 = vmatprep.subr.mxu0 0.0
    %754 = vmatpush1.msra.mxu0 0.0
    %755 = vmatprep.subr.mxu0 0.0
    %756 = vmatpush1.msra.mxu0 0.0
    %757 = vmatprep.subr.mxu0 0.0
    %758 = vmatpush1.msra.mxu0 0.0
    %759 = vmatprep.subr.mxu0 0.0
    %760 = vmatpush1.msra.mxu0 0.0
    %761 = vmatprep.subr.mxu0 0.0
    %762 = vmatpush1.msra.mxu0 0.0
    %763 = vmatprep.subr.mxu0 0.0
    %764 = vmatpush1.msra.mxu0 0.0
    %765 = vmatprep.subr.mxu0 0.0
    %766 = vmatpush1.msra.mxu0 0.0
    %767 = vmatprep.subr.mxu0 0.0
    %768 = vmatpush1.msra.mxu0 0.0
    %769 = vmatprep.subr.mxu0 0.0
    %770 = vmatpush1.msra.mxu0 0.0
    %771 = vmatprep.subr.mxu0 0.0
    %772 = vmatpush1.msra.mxu0 0.0
    %773 = vmatprep.subr.mxu0 0.0
    %774 = vmatpush1.msra.mxu0 0.0
    %775 = vmatprep.subr.mxu0 0.0
    %776 = vmatpush1.msra.mxu0 0.0
    %777 = vmatprep.subr.mxu0 0.0
    %778 = vmatpush1.msra.mxu0 0.0
    %779 = vmatprep.subr.mxu0 0.0
    %780 = vmatpush1.msra.mxu0 0.0
    %781 = vmatprep.subr.mxu0 0.0
    %782 = vmatpush1.msra.mxu0 0.0
    %783 = vmatprep.subr.mxu0 0.0
    %784 = vmatpush1.msra.mxu0 0.0
    %785 = vmatprep.subr.mxu0 0.0
    %786 = vmatpush1.msra.mxu0 0.0
    %787 = vmatprep.mubr.f32.mxu0 0.0
    %788 = vmatmul.mubr.f32.gmra.mrb[0].mxu0 %v721
    %v789 = vpop.f32.mrb[0].mxu0
    %v790 = vadd.f32 0.0, %v789
    %v791 = vpop.f32.mrb[0].mxu0
    %v792 = vadd.f32 0.0, %v791
    %793 = vdwg.mxu0
    %v794 = vadd.f32 %v612, %v790
    %v795 = vadd.f32 %v613, %v792
    %v796 = vld [vmem:[%s3] sm:$0xff]
    %798 = vset.pattern.permute.xlu0 0
    %799 = vperm.xlu0 %798, %v796
    %v800 = vpop.permute.xlu0 %799
    %v802 = vadd.f32 %v794, %v800
    %v803 = vadd.f32 %v795, %v800
    %v804 = vmax.f32 %v802, 0.0
    %v805 = vmax.f32 %v803, 0.0
    %v806 = vld [vmem:[%s4] sm:$0xff]
    %v807 = vld [vmem:[%s4 + $0x8] sm:$0xff]
    %v808 = vld [vmem:[%s4 + $0x10] sm:$0xff]
    %v809 = vld [vmem:[%s4 + $0x18] sm:$0xff]
    %v810 = vld [vmem:[%s4 + $0x20] sm:$0xff]
    %v811 = vld [vmem:[%s4 + $0x28] sm:$0xff]
    %v812 = vld [vmem:[%s4 + $0x30] sm:$0xff]
    %v813 = vld [vmem:[%s4 + $0x38] sm:$0xff]
    %v814 = vld [vmem:[%s4 + $0x40] sm:$0xff]
    %v815 = vld [vmem:[%s4 + $0x48] sm:$0xff]
    %v816 = vld [vmem:[%s4 + $0x50] sm:$0xff]
    %v817 = vld [vmem:[%s4 + $0x58] sm:$0xff]
    %v818 = vld [vmem:[%s4 + $0x60] sm:$0xff]
    %v819 = vld [vmem:[%s4 + $0x68] sm:$0xff]
    %v820 = vld [vmem:[%s4 + $0x70] sm:$0xff]
    %v821 = vld [vmem:[%s4 + $0x78] sm:$0xff]
    %v822 = vld [vmem:[%s4 + $0x80] sm:$0x3]
    %vm823 = vcmask 15360
    %v825 = vsel %vm823, %v805, 0
    %vm827 = vcmask 1041408
    %v829 = vsel %vm827, %v822, 0
    %831 = vmatprep.subr.mxu0 0.0
    %832 = vmatpush1.msra.mxu0 %v806
    %833 = vmatprep.subr.mxu0 0.0
    %834 = vmatpush1.msra.mxu0 %v807
    %835 = vmatprep.subr.mxu0 0.0
    %836 = vmatpush1.msra.mxu0 %v808
    %837 = vmatprep.subr.mxu0 0.0
    %838 = vmatpush1.msra.mxu0 %v809
    %839 = vmatprep.subr.mxu0 0.0
    %840 = vmatpush1.msra.mxu0 %v810
    %841 = vmatprep.subr.mxu0 0.0
    %842 = vmatpush1.msra.mxu0 %v811
    %843 = vmatprep.subr.mxu0 0.0
    %844 = vmatpush1.msra.mxu0 %v812
    %845 = vmatprep.subr.mxu0 0.0
    %846 = vmatpush1.msra.mxu0 %v813
    %847 = vmatprep.subr.mxu0 0.0
    %848 = vmatpush1.msra.mxu0 %v814
    %849 = vmatprep.subr.mxu0 0.0
    %850 = vmatpush1.msra.mxu0 %v815
    %851 = vmatprep.subr.mxu0 0.0
    %852 = vmatpush1.msra.mxu0 %v816
    %853 = vmatprep.subr.mxu0 0.0
    %854 = vmatpush1.msra.mxu0 %v817
    %855 = vmatprep.subr.mxu0 0.0
    %856 = vmatpush1.msra.mxu0 %v818
    %857 = vmatprep.subr.mxu0 0.0
    %858 = vmatpush1.msra.mxu0 %v819
    %859 = vmatprep.subr.mxu0 0.0
    %860 = vmatpush1.msra.mxu0 %v820
    %861 = vmatprep.subr.mxu0 0.0
    %862 = vmatpush1.msra.mxu0 %v821
    %863 = vmatprep.subr.mxu0 0.0
    %864 = vmatpush1.msra.mxu0 %v829
    %865 = vmatprep.subr.mxu0 0.0
    %866 = vmatpush1.msra.mxu0 0.0
    %867 = vmatprep.subr.mxu0 0.0
    %868 = vmatpush1.msra.mxu0 0.0
    %869 = vmatprep.subr.mxu0 0.0
    %870 = vmatpush1.msra.mxu0 0.0
    %871 = vmatprep.subr.mxu0 0.0
    %872 = vmatpush1.msra.mxu0 0.0
    %873 = vmatprep.subr.mxu0 0.0
    %874 = vmatpush1.msra.mxu0 0.0
    %875 = vmatprep.subr.mxu0 0.0
    %876 = vmatpush1.msra.mxu0 0.0
    %877 = vmatprep.subr.mxu0 0.0
    %878 = vmatpush1.msra.mxu0 0.0
    %879 = vmatprep.subr.mxu0 0.0
    %880 = vmatpush1.msra.mxu0 0.0
    %881 = vmatprep.subr.mxu0 0.0
    %882 = vmatpush1.msra.mxu0 0.0
    %883 = vmatprep.subr.mxu0 0.0
    %884 = vmatpush1.msra.mxu0 0.0
    %885 = vmatprep.subr.mxu0 0.0
    %886 = vmatpush1.msra.mxu0 0.0
    %887 = vmatprep.subr.mxu0 0.0
    %888 = vmatpush1.msra.mxu0 0.0
    %889 = vmatprep.subr.mxu0 0.0
    %890 = vmatpush1.msra.mxu0 0.0
    %891 = vmatprep.subr.mxu0 0.0
    %892 = vmatpush1.msra.mxu0 0.0
    %893 = vmatprep.subr.mxu0 0.0
    %894 = vmatpush1.msra.mxu0 0.0
    %895 = vmatprep.mubr.f32.mxu0 %v825
    %896 = vmatmul.mubr.f32.gmra.mrb[0].mxu0 %v804
    %v897 = vpop.f32.mrb[0].mxu0
    %v898 = vadd.f32 0.0, %v897
    %v899 = vpop.f32.mrb[0].mxu0
    %900 = vdwg.mxu0
    %s901 = scalar_lea.vmem %s4, 136
    %v902 = vld [vmem:[%s901] sm:$0xff]
    %v903 = vld [vmem:[%s901 + $0x8] sm:$0xff]
    %v904 = vld [vmem:[%s901 + $0x10] sm:$0xff]
    %v905 = vld [vmem:[%s901 + $0x18] sm:$0xff]
    %v906 = vld [vmem:[%s901 + $0x20] sm:$0xff]
    %v907 = vld [vmem:[%s901 + $0x28] sm:$0xff]
    %v908 = vld [vmem:[%s901 + $0x30] sm:$0xff]
    %v909 = vld [vmem:[%s901 + $0x38] sm:$0xff]
    %v910 = vld [vmem:[%s901 + $0x40] sm:$0xff]
    %v911 = vld [vmem:[%s901 + $0x48] sm:$0xff]
    %v912 = vld [vmem:[%s901 + $0x50] sm:$0xff]
    %v913 = vld [vmem:[%s901 + $0x58] sm:$0xff]
    %v914 = vld [vmem:[%s901 + $0x60] sm:$0xff]
    %v915 = vld [vmem:[%s901 + $0x68] sm:$0xff]
    %v916 = vld [vmem:[%s901 + $0x70] sm:$0xff]
    %v917 = vld [vmem:[%s901 + $0x78] sm:$0xff]
    %v918 = vld [vmem:[%s901 + $0x80] sm:$0x3]
    %v920 = vsel %vm827, %v918, 0
    %922 = vmatprep.subr.mxu0 0.0
    %923 = vmatpush1.msra.mxu0 %v902
    %924 = vmatprep.subr.mxu0 0.0
    %925 = vmatpush1.msra.mxu0 %v903
    %926 = vmatprep.subr.mxu0 0.0
    %927 = vmatpush1.msra.mxu0 %v904
    %928 = vmatprep.subr.mxu0 0.0
    %929 = vmatpush1.msra.mxu0 %v905
    %930 = vmatprep.subr.mxu0 0.0
    %931 = vmatpush1.msra.mxu0 %v906
    %932 = vmatprep.subr.mxu0 0.0
    %933 = vmatpush1.msra.mxu0 %v907
    %934 = vmatprep.subr.mxu0 0.0
    %935 = vmatpush1.msra.mxu0 %v908
    %936 = vmatprep.subr.mxu0 0.0
    %937 = vmatpush1.msra.mxu0 %v909
    %938 = vmatprep.subr.mxu0 0.0
    %939 = vmatpush1.msra.mxu0 %v910
    %940 = vmatprep.subr.mxu0 0.0
    %941 = vmatpush1.msra.mxu0 %v911
    %942 = vmatprep.subr.mxu0 0.0
    %943 = vmatpush1.msra.mxu0 %v912
    %944 = vmatprep.subr.mxu0 0.0
    %945 = vmatpush1.msra.mxu0 %v913
    %946 = vmatprep.subr.mxu0 0.0
    %947 = vmatpush1.msra.mxu0 %v914
    %948 = vmatprep.subr.mxu0 0.0
    %949 = vmatpush1.msra.mxu0 %v915
    %950 = vmatprep.subr.mxu0 0.0
    %951 = vmatpush1.msra.mxu0 %v916
    %952 = vmatprep.subr.mxu0 0.0
    %953 = vmatpush1.msra.mxu0 %v917
    %954 = vmatprep.subr.mxu0 0.0
    %955 = vmatpush1.msra.mxu0 %v920
    %956 = vmatprep.subr.mxu0 0.0
    %957 = vmatpush1.msra.mxu0 0.0
    %958 = vmatprep.subr.mxu0 0.0
    %959 = vmatpush1.msra.mxu0 0.0
    %960 = vmatprep.subr.mxu0 0.0
    %961 = vmatpush1.msra.mxu0 0.0
    %962 = vmatprep.subr.mxu0 0.0
    %963 = vmatpush1.msra.mxu0 0.0
    %964 = vmatprep.subr.mxu0 0.0
    %965 = vmatpush1.msra.mxu0 0.0
    %966 = vmatprep.subr.mxu0 0.0
    %967 = vmatpush1.msra.mxu0 0.0
    %968 = vmatprep.subr.mxu0 0.0
    %969 = vmatpush1.msra.mxu0 0.0
    %970 = vmatprep.subr.mxu0 0.0
    %971 = vmatpush1.msra.mxu0 0.0
    %972 = vmatprep.subr.mxu0 0.0
    %973 = vmatpush1.msra.mxu0 0.0
    %974 = vmatprep.subr.mxu0 0.0
    %975 = vmatpush1.msra.mxu0 0.0
    %976 = vmatprep.subr.mxu0 0.0
    %977 = vmatpush1.msra.mxu0 0.0
    %978 = vmatprep.subr.mxu0 0.0
    %979 = vmatpush1.msra.mxu0 0.0
    %980 = vmatprep.subr.mxu0 0.0
    %981 = vmatpush1.msra.mxu0 0.0
    %982 = vmatprep.subr.mxu0 0.0
    %983 = vmatpush1.msra.mxu0 0.0
    %984 = vmatprep.subr.mxu0 0.0
    %985 = vmatpush1.msra.mxu0 0.0
    %986 = vmatprep.mubr.f32.mxu0 %v825
    %987 = vmatmul.mubr.f32.gmra.mrb[0].mxu0 %v804
    %v988 = vpop.f32.mrb[0].mxu0
    %v989 = vadd.f32 0.0, %v988
    %v990 = vpop.f32.mrb[0].mxu0
    %991 = vdwg.mxu0
    %v992 = vmax.f32 %v898, %v989
    %s993 = scalar_lea.vmem %s4, 272
    %v994 = vld [vmem:[%s993] sm:$0xff]
    %v995 = vld [vmem:[%s993 + $0x8] sm:$0xff]
    %v996 = vld [vmem:[%s993 + $0x10] sm:$0xff]
    %v997 = vld [vmem:[%s993 + $0x18] sm:$0xff]
    %v998 = vld [vmem:[%s993 + $0x20] sm:$0xff]
    %v999 = vld [vmem:[%s993 + $0x28] sm:$0xff]
    %v1000 = vld [vmem:[%s993 + $0x30] sm:$0xff]
    %v1001 = vld [vmem:[%s993 + $0x38] sm:$0xff]
    %v1002 = vld [vmem:[%s993 + $0x40] sm:$0xff]
    %v1003 = vld [vmem:[%s993 + $0x48] sm:$0xff]
    %v1004 = vld [vmem:[%s993 + $0x50] sm:$0xff]
    %v1005 = vld [vmem:[%s993 + $0x58] sm:$0xff]
    %v1006 = vld [vmem:[%s993 + $0x60] sm:$0xff]
    %v1007 = vld [vmem:[%s993 + $0x68] sm:$0xff]
    %v1008 = vld [vmem:[%s993 + $0x70] sm:$0xff]
    %v1009 = vld [vmem:[%s993 + $0x78] sm:$0xff]
    %v1010 = vld [vmem:[%s993 + $0x80] sm:$0x3]
    %v1012 = vsel %vm827, %v1010, 0
    %1014 = vmatprep.subr.mxu0 0.0
    %1015 = vmatpush1.msra.mxu0 %v994
    %1016 = vmatprep.subr.mxu0 0.0
    %1017 = vmatpush1.msra.mxu0 %v995
    %1018 = vmatprep.subr.mxu0 0.0
    %1019 = vmatpush1.msra.mxu0 %v996
    %1020 = vmatprep.subr.mxu0 0.0
    %1021 = vmatpush1.msra.mxu0 %v997
    %1022 = vmatprep.subr.mxu0 0.0
    %1023 = vmatpush1.msra.mxu0 %v998
    %1024 = vmatprep.subr.mxu0 0.0
    %1025 = vmatpush1.msra.mxu0 %v999
    %1026 = vmatprep.subr.mxu0 0.0
    %1027 = vmatpush1.msra.mxu0 %v1000
    %1028 = vmatprep.subr.mxu0 0.0
    %1029 = vmatpush1.msra.mxu0 %v1001
    %1030 = vmatprep.subr.mxu0 0.0
    %1031 = vmatpush1.msra.mxu0 %v1002
    %1032 = vmatprep.subr.mxu0 0.0
    %1033 = vmatpush1.msra.mxu0 %v1003
    %1034 = vmatprep.subr.mxu0 0.0
    %1035 = vmatpush1.msra.mxu0 %v1004
    %1036 = vmatprep.subr.mxu0 0.0
    %1037 = vmatpush1.msra.mxu0 %v1005
    %1038 = vmatprep.subr.mxu0 0.0
    %1039 = vmatpush1.msra.mxu0 %v1006
    %1040 = vmatprep.subr.mxu0 0.0
    %1041 = vmatpush1.msra.mxu0 %v1007
    %1042 = vmatprep.subr.mxu0 0.0
    %1043 = vmatpush1.msra.mxu0 %v1008
    %1044 = vmatprep.subr.mxu0 0.0
    %1045 = vmatpush1.msra.mxu0 %v1009
    %1046 = vmatprep.subr.mxu0 0.0
    %1047 = vmatpush1.msra.mxu0 %v1012
    %1048 = vmatprep.subr.mxu0 0.0
    %1049 = vmatpush1.msra.mxu0 0.0
    %1050 = vmatprep.subr.mxu0 0.0
    %1051 = vmatpush1.msra.mxu0 0.0
    %1052 = vmatprep.subr.mxu0 0.0
    %1053 = vmatpush1.msra.mxu0 0.0
    %1054 = vmatprep.subr.mxu0 0.0
    %1055 = vmatpush1.msra.mxu0 0.0
    %1056 = vmatprep.subr.mxu0 0.0
    %1057 = vmatpush1.msra.mxu0 0.0
    %1058 = vmatprep.subr.mxu0 0.0
    %1059 = vmatpush1.msra.mxu0 0.0
    %1060 = vmatprep.subr.mxu0 0.0
    %1061 = vmatpush1.msra.mxu0 0.0
    %1062 = vmatprep.subr.mxu0 0.0
    %1063 = vmatpush1.msra.mxu0 0.0
    %1064 = vmatprep.subr.mxu0 0.0
    %1065 = vmatpush1.msra.mxu0 0.0
    %1066 = vmatprep.subr.mxu0 0.0
    %1067 = vmatpush1.msra.mxu0 0.0
    %1068 = vmatprep.subr.mxu0 0.0
    %1069 = vmatpush1.msra.mxu0 0.0
    %1070 = vmatprep.subr.mxu0 0.0
    %1071 = vmatpush1.msra.mxu0 0.0
    %1072 = vmatprep.subr.mxu0 0.0
    %1073 = vmatpush1.msra.mxu0 0.0
    %1074 = vmatprep.subr.mxu0 0.0
    %1075 = vmatpush1.msra.mxu0 0.0
    %1076 = vmatprep.subr.mxu0 0.0
    %1077 = vmatpush1.msra.mxu0 0.0
    %1078 = vmatprep.mubr.f32.mxu0 %v825
    %1079 = vmatmul.mubr.f32.gmra.mrb[0].mxu0 %v804
    %v1080 = vpop.f32.mrb[0].mxu0
    %v1081 = vadd.f32 0.0, %v1080
    %v1082 = vpop.f32.mrb[0].mxu0
    %1083 = vdwg.mxu0
    %v1084 = vmax.f32 %v992, %v1081
    %s1085 = scalar_lea.vmem %s4, 408
    %v1086 = vld [vmem:[%s1085] sm:$0xff]
    %v1087 = vld [vmem:[%s1085 + $0x8] sm:$0xff]
    %v1088 = vld [vmem:[%s1085 + $0x10] sm:$0xff]
    %v1089 = vld [vmem:[%s1085 + $0x18] sm:$0xff]
    %v1090 = vld [vmem:[%s1085 + $0x20] sm:$0xff]
    %v1091 = vld [vmem:[%s1085 + $0x28] sm:$0xff]
    %v1092 = vld [vmem:[%s1085 + $0x30] sm:$0xff]
    %v1093 = vld [vmem:[%s1085 + $0x38] sm:$0xff]
    %v1094 = vld [vmem:[%s1085 + $0x40] sm:$0xff]
    %v1095 = vld [vmem:[%s1085 + $0x48] sm:$0xff]
    %v1096 = vld [vmem:[%s1085 + $0x50] sm:$0xff]
    %v1097 = vld [vmem:[%s1085 + $0x58] sm:$0xff]
    %v1098 = vld [vmem:[%s1085 + $0x60] sm:$0xff]
    %v1099 = vld [vmem:[%s1085 + $0x68] sm:$0xff]
    %v1100 = vld [vmem:[%s1085 + $0x70] sm:$0xff]
    %v1101 = vld [vmem:[%s1085 + $0x78] sm:$0xff]
    %v1102 = vld [vmem:[%s1085 + $0x80] sm:$0x3]
    %v1104 = vsel %vm827, %v1102, 0
    %1106 = vmatprep.subr.mxu0 0.0
    %1107 = vmatpush1.msra.mxu0 %v1086
    %1108 = vmatprep.subr.mxu0 0.0
    %1109 = vmatpush1.msra.mxu0 %v1087
    %1110 = vmatprep.subr.mxu0 0.0
    %1111 = vmatpush1.msra.mxu0 %v1088
    %1112 = vmatprep.subr.mxu0 0.0
    %1113 = vmatpush1.msra.mxu0 %v1089
    %1114 = vmatprep.subr.mxu0 0.0
    %1115 = vmatpush1.msra.mxu0 %v1090
    %1116 = vmatprep.subr.mxu0 0.0
    %1117 = vmatpush1.msra.mxu0 %v1091
    %1118 = vmatprep.subr.mxu0 0.0
    %1119 = vmatpush1.msra.mxu0 %v1092
    %1120 = vmatprep.subr.mxu0 0.0
    %1121 = vmatpush1.msra.mxu0 %v1093
    %1122 = vmatprep.subr.mxu0 0.0
    %1123 = vmatpush1.msra.mxu0 %v1094
    %1124 = vmatprep.subr.mxu0 0.0
    %1125 = vmatpush1.msra.mxu0 %v1095
    %1126 = vmatprep.subr.mxu0 0.0
    %1127 = vmatpush1.msra.mxu0 %v1096
    %1128 = vmatprep.subr.mxu0 0.0
    %1129 = vmatpush1.msra.mxu0 %v1097
    %1130 = vmatprep.subr.mxu0 0.0
    %1131 = vmatpush1.msra.mxu0 %v1098
    %1132 = vmatprep.subr.mxu0 0.0
    %1133 = vmatpush1.msra.mxu0 %v1099
    %1134 = vmatprep.subr.mxu0 0.0
    %1135 = vmatpush1.msra.mxu0 %v1100
    %1136 = vmatprep.subr.mxu0 0.0
    %1137 = vmatpush1.msra.mxu0 %v1101
    %1138 = vmatprep.subr.mxu0 0.0
    %1139 = vmatpush1.msra.mxu0 %v1104
    %1140 = vmatprep.subr.mxu0 0.0
    %1141 = vmatpush1.msra.mxu0 0.0
    %1142 = vmatprep.subr.mxu0 0.0
    %1143 = vmatpush1.msra.mxu0 0.0
    %1144 = vmatprep.subr.mxu0 0.0
    %1145 = vmatpush1.msra.mxu0 0.0
    %1146 = vmatprep.subr.mxu0 0.0
    %1147 = vmatpush1.msra.mxu0 0.0
    %1148 = vmatprep.subr.mxu0 0.0
    %1149 = vmatpush1.msra.mxu0 0.0
    %1150 = vmatprep.subr.mxu0 0.0
    %1151 = vmatpush1.msra.mxu0 0.0
    %1152 = vmatprep.subr.mxu0 0.0
    %1153 = vmatpush1.msra.mxu0 0.0
    %1154 = vmatprep.subr.mxu0 0.0
    %1155 = vmatpush1.msra.mxu0 0.0
    %1156 = vmatprep.subr.mxu0 0.0
    %1157 = vmatpush1.msra.mxu0 0.0
    %1158 = vmatprep.subr.mxu0 0.0
    %1159 = vmatpush1.msra.mxu0 0.0
    %1160 = vmatprep.subr.mxu0 0.0
    %1161 = vmatpush1.msra.mxu0 0.0
    %1162 = vmatprep.subr.mxu0 0.0
    %1163 = vmatpush1.msra.mxu0 0.0
    %1164 = vmatprep.subr.mxu0 0.0
    %1165 = vmatpush1.msra.mxu0 0.0
    %1166 = vmatprep.subr.mxu0 0.0
    %1167 = vmatpush1.msra.mxu0 0.0
    %1168 = vmatprep.subr.mxu0 0.0
    %1169 = vmatpush1.msra.mxu0 0.0
    %1170 = vmatprep.mubr.f32.mxu0 %v825
    %1171 = vmatmul.mubr.f32.gmra.mrb[0].mxu0 %v804
    %v1172 = vpop.f32.mrb[0].mxu0
    %v1173 = vadd.f32 0.0, %v1172
    %v1174 = vpop.f32.mrb[0].mxu0
    %1175 = vdwg.mxu0
    %v1176 = vmax.f32 %v1084, %v1173
    %v1177 = vld [vmem:[%s6] sm:$0xff]
    %v1178 = vld [vmem:[%s5] sm:$0xff]
    %v1179 = vld [vmem:[%s5 + $0x8] sm:$0xff]
    %v1180 = vld [vmem:[%s5 + $0x10] sm:$0xff]
    %v1181 = vld [vmem:[%s5 + $0x18] sm:$0x3]
    %vm1182 = vcmask 211968
    %v1184 = vsel %vm1182, %v1176, 0
    %v1187 = vsel %vm827, %v1181, 0
    %1189 = vmatprep.subr.mxu0 0.0
    %1190 = vmatpush1.msra.mxu0 %v1178
    %1191 = vmatprep.subr.mxu0 0.0
    %1192 = vmatpush1.msra.mxu0 %v1179
    %1193 = vmatprep.subr.mxu0 0.0
    %1194 = vmatpush1.msra.mxu0 %v1180
    %1195 = vmatprep.subr.mxu0 0.0
    %1196 = vmatpush1.msra.mxu0 %v1187
    %1197 = vmatprep.subr.mxu0 0.0
    %1198 = vmatpush1.msra.mxu0 0.0
    %1199 = vmatprep.subr.mxu0 0.0
    %1200 = vmatpush1.msra.mxu0 0.0
    %1201 = vmatprep.subr.mxu0 0.0
    %1202 = vmatpush1.msra.mxu0 0.0
    %1203 = vmatprep.subr.mxu0 0.0
    %1204 = vmatpush1.msra.mxu0 0.0
    %1205 = vmatprep.subr.mxu0 0.0
    %1206 = vmatpush1.msra.mxu0 0.0
    %1207 = vmatprep.subr.mxu0 0.0
    %1208 = vmatpush1.msra.mxu0 0.0
    %1209 = vmatprep.subr.mxu0 0.0
    %1210 = vmatpush1.msra.mxu0 0.0
    %1211 = vmatprep.subr.mxu0 0.0
    %1212 = vmatpush1.msra.mxu0 0.0
    %1213 = vmatprep.subr.mxu0 0.0
    %1214 = vmatpush1.msra.mxu0 0.0
    %1215 = vmatprep.subr.mxu0 0.0
    %1216 = vmatpush1.msra.mxu0 0.0
    %1217 = vmatprep.subr.mxu0 0.0
    %1218 = vmatpush1.msra.mxu0 0.0
    %1219 = vmatprep.subr.mxu0 0.0
    %1220 = vmatpush1.msra.mxu0 0.0
    %1221 = vmatprep.subr.mxu0 0.0
    %1222 = vmatpush1.msra.mxu0 0.0
    %1223 = vmatprep.subr.mxu0 0.0
    %1224 = vmatpush1.msra.mxu0 0.0
    %1225 = vmatprep.subr.mxu0 0.0
    %1226 = vmatpush1.msra.mxu0 0.0
    %1227 = vmatprep.subr.mxu0 0.0
    %1228 = vmatpush1.msra.mxu0 0.0
    %1229 = vmatprep.subr.mxu0 0.0
    %1230 = vmatpush1.msra.mxu0 0.0
    %1231 = vmatprep.subr.mxu0 0.0
    %1232 = vmatpush1.msra.mxu0 0.0
    %1233 = vmatprep.subr.mxu0 0.0
    %1234 = vmatpush1.msra.mxu0 0.0
    %1235 = vmatprep.subr.mxu0 0.0
    %1236 = vmatpush1.msra.mxu0 0.0
    %1237 = vmatprep.subr.mxu0 0.0
    %1238 = vmatpush1.msra.mxu0 0.0
    %1239 = vmatprep.subr.mxu0 0.0
    %1240 = vmatpush1.msra.mxu0 0.0
    %1241 = vmatprep.subr.mxu0 0.0
    %1242 = vmatpush1.msra.mxu0 0.0
    %1243 = vmatprep.subr.mxu0 0.0
    %1244 = vmatpush1.msra.mxu0 0.0
    %1245 = vmatprep.subr.mxu0 0.0
    %1246 = vmatpush1.msra.mxu0 0.0
    %1247 = vmatprep.subr.mxu0 0.0
    %1248 = vmatpush1.msra.mxu0 0.0
    %1249 = vmatprep.subr.mxu0 0.0
    %1250 = vmatpush1.msra.mxu0 0.0
    %1251 = vmatprep.subr.mxu0 0.0
    %1252 = vmatpush1.msra.mxu0 0.0
    %1253 = vmatprep.mubr.f32.mxu0 0.0
    %1254 = vmatmul.mubr.f32.gmra.mrb[0].mxu0 %v1184
    %v1255 = vpop.f32.mrb[0].mxu0
    %v1256 = vadd.f32 0.0, %v1255
    %v1257 = vpop.f32.mrb[0].mxu0
    %1258 = vdwg.mxu0
    %v1259 = vld [vmem:[%s7] sm:$0xff]
    %1261 = vset.pattern.permute.xlu0 0
    %1262 = vperm.xlu0 %1261, %v1259
    %v1263 = vpop.permute.xlu0 %1262
    %v1266 = vsel %vm283, %v1177, 0
    %1268 = vmatprep.subr.mxu0 0.0
    %1269 = vmatpush1.msra.mxu0 %v1256
    %1270 = vmatprep.subr.mxu0 0.0
    %1271 = vmatpush1.msra.mxu0 0.0
    %1272 = vmatprep.subr.mxu0 0.0
    %1273 = vmatpush1.msra.mxu0 0.0
    %1274 = vmatprep.subr.mxu0 0.0
    %1275 = vmatpush1.msra.mxu0 0.0
    %1276 = vmatprep.subr.mxu0 0.0
    %1277 = vmatpush1.msra.mxu0 0.0
    %1278 = vmatprep.subr.mxu0 0.0
    %1279 = vmatpush1.msra.mxu0 0.0
    %1280 = vmatprep.subr.mxu0 0.0
    %1281 = vmatpush1.msra.mxu0 0.0
    %1282 = vmatprep.subr.mxu0 0.0
    %1283 = vmatpush1.msra.mxu0 0.0
    %1284 = vmatprep.subr.mxu0 0.0
    %1285 = vmatpush1.msra.mxu0 0.0
    %1286 = vmatprep.subr.mxu0 0.0
    %1287 = vmatpush1.msra.mxu0 0.0
    %1288 = vmatprep.subr.mxu0 0.0
    %1289 = vmatpush1.msra.mxu0 0.0
    %1290 = vmatprep.subr.mxu0 0.0
    %1291 = vmatpush1.msra.mxu0 0.0
    %1292 = vmatprep.subr.mxu0 0.0
    %1293 = vmatpush1.msra.mxu0 0.0
    %1294 = vmatprep.subr.mxu0 0.0
    %1295 = vmatpush1.msra.mxu0 0.0
    %1296 = vmatprep.subr.mxu0 0.0
    %1297 = vmatpush1.msra.mxu0 0.0
    %1298 = vmatprep.subr.mxu0 0.0
    %1299 = vmatpush1.msra.mxu0 0.0
    %1300 = vmatprep.subr.mxu0 0.0
    %1301 = vmatpush1.msra.mxu0 0.0
    %1302 = vmatprep.subr.mxu0 0.0
    %1303 = vmatpush1.msra.mxu0 0.0
    %1304 = vmatprep.subr.mxu0 0.0
    %1305 = vmatpush1.msra.mxu0 0.0
    %1306 = vmatprep.subr.mxu0 0.0
    %1307 = vmatpush1.msra.mxu0 0.0
    %1308 = vmatprep.subr.mxu0 0.0
    %1309 = vmatpush1.msra.mxu0 0.0
    %1310 = vmatprep.subr.mxu0 0.0
    %1311 = vmatpush1.msra.mxu0 0.0
    %1312 = vmatprep.subr.mxu0 0.0
    %1313 = vmatpush1.msra.mxu0 0.0
    %1314 = vmatprep.subr.mxu0 0.0
    %1315 = vmatpush1.msra.mxu0 0.0
    %1316 = vmatprep.subr.mxu0 0.0
    %1317 = vmatpush1.msra.mxu0 0.0
    %1318 = vmatprep.subr.mxu0 0.0
    %1319 = vmatpush1.msra.mxu0 0.0
    %1320 = vmatprep.subr.mxu0 0.0
    %1321 = vmatpush1.msra.mxu0 0.0
    %1322 = vmatprep.subr.mxu0 0.0
    %1323 = vmatpush1.msra.mxu0 0.0
    %1324 = vmatprep.subr.mxu0 0.0
    %1325 = vmatpush1.msra.mxu0 0.0
    %1326 = vmatprep.subr.mxu0 0.0
    %1327 = vmatpush1.msra.mxu0 0.0
    %1328 = vmatprep.subr.mxu0 0.0
    %1329 = vmatpush1.msra.mxu0 0.0
    %1330 = vmatprep.subr.mxu0 0.0
    %1331 = vmatpush1.msra.mxu0 0.0
    %1332 = vmatprep.mubr.f32.mxu0 0.0
    %1333 = vmatmul.mubr.f32.gmra.mrb[0].mxu0 %v1266
    %v1334 = vpop.f32.mrb[0].mxu0
    %v1335 = vadd.f32 %v1263, %v1334
    %v1336 = vpop.f32.mrb[0].mxu0
    %1337 = vdwg.mxu0
    %v1338 = vmax.f32 %v1335, 0.0
    %v1339 = vld [vmem:[#allocation5] sm:$0xff]
    %v1340 = vld [vmem:[#allocation5 + $0x8] sm:$0xff]
    %v1341 = vld [vmem:[#allocation5 + $0x10] sm:$0xff]
    %v1342 = vld [vmem:[#allocation5 + $0x18] sm:$0xff]
    %v1343 = vld [vmem:[#allocation5 + $0x20] sm:$0xff]
    %v1344 = vld [vmem:[#allocation5 + $0x28] sm:$0xff]
    %v1345 = vld [vmem:[#allocation5 + $0x30] sm:$0xff]
    %v1346 = vld [vmem:[#allocation5 + $0x38] sm:$0xf]
    %vm1347 = vcmask 490496
    %v1349 = vsel %vm1347, %v1338, 0
    %v1352 = vsel %vm98, %v1346, 0
    %1354 = vmatprep.subr.mxu0 0.0
    %1355 = vmatpush1.msra.mxu0 %v1339
    %1356 = vmatprep.subr.mxu0 0.0
    %1357 = vmatpush1.msra.mxu0 %v1340
    %1358 = vmatprep.subr.mxu0 0.0
    %1359 = vmatpush1.msra.mxu0 %v1341
    %1360 = vmatprep.subr.mxu0 0.0
    %1361 = vmatpush1.msra.mxu0 %v1342
    %1362 = vmatprep.subr.mxu0 0.0
    %1363 = vmatpush1.msra.mxu0 %v1343
    %1364 = vmatprep.subr.mxu0 0.0
    %1365 = vmatpush1.msra.mxu0 %v1344
    %1366 = vmatprep.subr.mxu0 0.0
    %1367 = vmatpush1.msra.mxu0 %v1345
    %1368 = vmatprep.subr.mxu0 0.0
    %1369 = vmatpush1.msra.mxu0 %v1352
    %1370 = vmatprep.subr.mxu0 0.0
    %1371 = vmatpush1.msra.mxu0 0.0
    %1372 = vmatprep.subr.mxu0 0.0
    %1373 = vmatpush1.msra.mxu0 0.0
    %1374 = vmatprep.subr.mxu0 0.0
    %1375 = vmatpush1.msra.mxu0 0.0
    %1376 = vmatprep.subr.mxu0 0.0
    %1377 = vmatpush1.msra.mxu0 0.0
    %1378 = vmatprep.subr.mxu0 0.0
    %1379 = vmatpush1.msra.mxu0 0.0
    %1380 = vmatprep.subr.mxu0 0.0
    %1381 = vmatpush1.msra.mxu0 0.0
    %1382 = vmatprep.subr.mxu0 0.0
    %1383 = vmatpush1.msra.mxu0 0.0
    %1384 = vmatprep.subr.mxu0 0.0
    %1385 = vmatpush1.msra.mxu0 0.0
    %1386 = vmatprep.subr.mxu0 0.0
    %1387 = vmatpush1.msra.mxu0 0.0
    %1388 = vmatprep.subr.mxu0 0.0
    %1389 = vmatpush1.msra.mxu0 0.0
    %1390 = vmatprep.subr.mxu0 0.0
    %1391 = vmatpush1.msra.mxu0 0.0
    %1392 = vmatprep.subr.mxu0 0.0
    %1393 = vmatpush1.msra.mxu0 0.0
    %1394 = vmatprep.subr.mxu0 0.0
    %1395 = vmatpush1.msra.mxu0 0.0
    %1396 = vmatprep.subr.mxu0 0.0
    %1397 = vmatpush1.msra.mxu0 0.0
    %1398 = vmatprep.subr.mxu0 0.0
    %1399 = vmatpush1.msra.mxu0 0.0
    %1400 = vmatprep.subr.mxu0 0.0
    %1401 = vmatpush1.msra.mxu0 0.0
    %1402 = vmatprep.subr.mxu0 0.0
    %1403 = vmatpush1.msra.mxu0 0.0
    %1404 = vmatprep.subr.mxu0 0.0
    %1405 = vmatpush1.msra.mxu0 0.0
    %1406 = vmatprep.subr.mxu0 0.0
    %1407 = vmatpush1.msra.mxu0 0.0
    %1408 = vmatprep.subr.mxu0 0.0
    %1409 = vmatpush1.msra.mxu0 0.0
    %1410 = vmatprep.subr.mxu0 0.0
    %1411 = vmatpush1.msra.mxu0 0.0
    %1412 = vmatprep.subr.mxu0 0.0
    %1413 = vmatpush1.msra.mxu0 0.0
    %1414 = vmatprep.subr.mxu0 0.0
    %1415 = vmatpush1.msra.mxu0 0.0
    %1416 = vmatprep.subr.mxu0 0.0
    %1417 = vmatpush1.msra.mxu0 0.0
    %1418 = vmatprep.mubr.f32.mxu0 0.0
    %1419 = vmatmul.mubr.f32.gmra.mrb[0].mxu0 %v1349
    %v1420 = vpop.f32.mrb[0].mxu0
    %v1421 = vadd.f32 0.0, %v1420
    %v1422 = vpop.f32.mrb[0].mxu0
    %1423 = vdwg.mxu0
    %s1424 = scalar_lea.vmem [#allocation5], 64
    %v1425 = vld [vmem:[%s1424] sm:$0xff]
    %v1426 = vld [vmem:[%s1424 + $0x8] sm:$0xff]
    %v1427 = vld [vmem:[%s1424 + $0x10] sm:$0xff]
    %v1428 = vld [vmem:[%s1424 + $0x18] sm:$0xff]
    %v1429 = vld [vmem:[%s1424 + $0x20] sm:$0xff]
    %v1430 = vld [vmem:[%s1424 + $0x28] sm:$0xff]
    %v1431 = vld [vmem:[%s1424 + $0x30] sm:$0xff]
    %v1432 = vld [vmem:[%s1424 + $0x38] sm:$0xf]
    %v1434 = vsel %vm98, %v1432, 0
    %1436 = vmatprep.subr.mxu0 0.0
    %1437 = vmatpush1.msra.mxu0 %v1425
    %1438 = vmatprep.subr.mxu0 0.0
    %1439 = vmatpush1.msra.mxu0 %v1426
    %1440 = vmatprep.subr.mxu0 0.0
    %1441 = vmatpush1.msra.mxu0 %v1427
    %1442 = vmatprep.subr.mxu0 0.0
    %1443 = vmatpush1.msra.mxu0 %v1428
    %1444 = vmatprep.subr.mxu0 0.0
    %1445 = vmatpush1.msra.mxu0 %v1429
    %1446 = vmatprep.subr.mxu0 0.0
    %1447 = vmatpush1.msra.mxu0 %v1430
    %1448 = vmatprep.subr.mxu0 0.0
    %1449 = vmatpush1.msra.mxu0 %v1431
    %1450 = vmatprep.subr.mxu0 0.0
    %1451 = vmatpush1.msra.mxu0 %v1434
    %1452 = vmatprep.subr.mxu0 0.0
    %1453 = vmatpush1.msra.mxu0 0.0
    %1454 = vmatprep.subr.mxu0 0.0
    %1455 = vmatpush1.msra.mxu0 0.0
    %1456 = vmatprep.subr.mxu0 0.0
    %1457 = vmatpush1.msra.mxu0 0.0
    %1458 = vmatprep.subr.mxu0 0.0
    %1459 = vmatpush1.msra.mxu0 0.0
    %1460 = vmatprep.subr.mxu0 0.0
    %1461 = vmatpush1.msra.mxu0 0.0
    %1462 = vmatprep.subr.mxu0 0.0
    %1463 = vmatpush1.msra.mxu0 0.0
    %1464 = vmatprep.subr.mxu0 0.0
    %1465 = vmatpush1.msra.mxu0 0.0
    %1466 = vmatprep.subr.mxu0 0.0
    %1467 = vmatpush1.msra.mxu0 0.0
    %1468 = vmatprep.subr.mxu0 0.0
    %1469 = vmatpush1.msra.mxu0 0.0
    %1470 = vmatprep.subr.mxu0 0.0
    %1471 = vmatpush1.msra.mxu0 0.0
    %1472 = vmatprep.subr.mxu0 0.0
    %1473 = vmatpush1.msra.mxu0 0.0
    %1474 = vmatprep.subr.mxu0 0.0
    %1475 = vmatpush1.msra.mxu0 0.0
    %1476 = vmatprep.subr.mxu0 0.0
    %1477 = vmatpush1.msra.mxu0 0.0
    %1478 = vmatprep.subr.mxu0 0.0
    %1479 = vmatpush1.msra.mxu0 0.0
    %1480 = vmatprep.subr.mxu0 0.0
    %1481 = vmatpush1.msra.mxu0 0.0
    %1482 = vmatprep.subr.mxu0 0.0
    %1483 = vmatpush1.msra.mxu0 0.0
    %1484 = vmatprep.subr.mxu0 0.0
    %1485 = vmatpush1.msra.mxu0 0.0
    %1486 = vmatprep.subr.mxu0 0.0
    %1487 = vmatpush1.msra.mxu0 0.0
    %1488 = vmatprep.subr.mxu0 0.0
    %1489 = vmatpush1.msra.mxu0 0.0
    %1490 = vmatprep.subr.mxu0 0.0
    %1491 = vmatpush1.msra.mxu0 0.0
    %1492 = vmatprep.subr.mxu0 0.0
    %1493 = vmatpush1.msra.mxu0 0.0
    %1494 = vmatprep.subr.mxu0 0.0
    %1495 = vmatpush1.msra.mxu0 0.0
    %1496 = vmatprep.subr.mxu0 0.0
    %1497 = vmatpush1.msra.mxu0 0.0
    %1498 = vmatprep.subr.mxu0 0.0
    %1499 = vmatpush1.msra.mxu0 0.0
    %1500 = vmatprep.mubr.f32.mxu0 0.0
    %1501 = vmatmul.mubr.f32.gmra.mrb[0].mxu0 %v1349
    %v1502 = vpop.f32.mrb[0].mxu0
    %v1503 = vadd.f32 0.0, %v1502
    %v1504 = vpop.f32.mrb[0].mxu0
    %1505 = vdwg.mxu0
    %v1506 = vmax.f32 %v1421, %v1503
    %s1507 = scalar_lea.vmem [#allocation5], 128
    %v1508 = vld [vmem:[%s1507] sm:$0xff]
    %v1509 = vld [vmem:[%s1507 + $0x8] sm:$0xff]
    %v1510 = vld [vmem:[%s1507 + $0x10] sm:$0xff]
    %v1511 = vld [vmem:[%s1507 + $0x18] sm:$0xff]
    %v1512 = vld [vmem:[%s1507 + $0x20] sm:$0xff]
    %v1513 = vld [vmem:[%s1507 + $0x28] sm:$0xff]
    %v1514 = vld [vmem:[%s1507 + $0x30] sm:$0xff]
    %v1515 = vld [vmem:[%s1507 + $0x38] sm:$0xf]
    %v1517 = vsel %vm98, %v1515, 0
    %1519 = vmatprep.subr.mxu0 0.0
    %1520 = vmatpush1.msra.mxu0 %v1508
    %1521 = vmatprep.subr.mxu0 0.0
    %1522 = vmatpush1.msra.mxu0 %v1509
    %1523 = vmatprep.subr.mxu0 0.0
    %1524 = vmatpush1.msra.mxu0 %v1510
    %1525 = vmatprep.subr.mxu0 0.0
    %1526 = vmatpush1.msra.mxu0 %v1511
    %1527 = vmatprep.subr.mxu0 0.0
    %1528 = vmatpush1.msra.mxu0 %v1512
    %1529 = vmatprep.subr.mxu0 0.0
    %1530 = vmatpush1.msra.mxu0 %v1513
    %1531 = vmatprep.subr.mxu0 0.0
    %1532 = vmatpush1.msra.mxu0 %v1514
    %1533 = vmatprep.subr.mxu0 0.0
    %1534 = vmatpush1.msra.mxu0 %v1517
    %1535 = vmatprep.subr.mxu0 0.0
    %1536 = vmatpush1.msra.mxu0 0.0
    %1537 = vmatprep.subr.mxu0 0.0
    %1538 = vmatpush1.msra.mxu0 0.0
    %1539 = vmatprep.subr.mxu0 0.0
    %1540 = vmatpush1.msra.mxu0 0.0
    %1541 = vmatprep.subr.mxu0 0.0
    %1542 = vmatpush1.msra.mxu0 0.0
    %1543 = vmatprep.subr.mxu0 0.0
    %1544 = vmatpush1.msra.mxu0 0.0
    %1545 = vmatprep.subr.mxu0 0.0
    %1546 = vmatpush1.msra.mxu0 0.0
    %1547 = vmatprep.subr.mxu0 0.0
    %1548 = vmatpush1.msra.mxu0 0.0
    %1549 = vmatprep.subr.mxu0 0.0
    %1550 = vmatpush1.msra.mxu0 0.0
    %1551 = vmatprep.subr.mxu0 0.0
    %1552 = vmatpush1.msra.mxu0 0.0
    %1553 = vmatprep.subr.mxu0 0.0
    %1554 = vmatpush1.msra.mxu0 0.0
    %1555 = vmatprep.subr.mxu0 0.0
    %1556 = vmatpush1.msra.mxu0 0.0
    %1557 = vmatprep.subr.mxu0 0.0
    %1558 = vmatpush1.msra.mxu0 0.0
    %1559 = vmatprep.subr.mxu0 0.0
    %1560 = vmatpush1.msra.mxu0 0.0
    %1561 = vmatprep.subr.mxu0 0.0
    %1562 = vmatpush1.msra.mxu0 0.0
    %1563 = vmatprep.subr.mxu0 0.0
    %1564 = vmatpush1.msra.mxu0 0.0
    %1565 = vmatprep.subr.mxu0 0.0
    %1566 = vmatpush1.msra.mxu0 0.0
    %1567 = vmatprep.subr.mxu0 0.0
    %1568 = vmatpush1.msra.mxu0 0.0
    %1569 = vmatprep.subr.mxu0 0.0
    %1570 = vmatpush1.msra.mxu0 0.0
    %1571 = vmatprep.subr.mxu0 0.0
    %1572 = vmatpush1.msra.mxu0 0.0
    %1573 = vmatprep.subr.mxu0 0.0
    %1574 = vmatpush1.msra.mxu0 0.0
    %1575 = vmatprep.subr.mxu0 0.0
    %1576 = vmatpush1.msra.mxu0 0.0
    %1577 = vmatprep.subr.mxu0 0.0
    %1578 = vmatpush1.msra.mxu0 0.0
    %1579 = vmatprep.subr.mxu0 0.0
    %1580 = vmatpush1.msra.mxu0 0.0
    %1581 = vmatprep.subr.mxu0 0.0
    %1582 = vmatpush1.msra.mxu0 0.0
    %1583 = vmatprep.mubr.f32.mxu0 0.0
    %1584 = vmatmul.mubr.f32.gmra.mrb[0].mxu0 %v1349
    %v1585 = vpop.f32.mrb[0].mxu0
    %v1586 = vadd.f32 0.0, %v1585
    %v1587 = vpop.f32.mrb[0].mxu0
    %1588 = vdwg.mxu0
    %v1589 = vmax.f32 %v1506, %v1586
    %s1590 = scalar_lea.vmem [#allocation5], 192
    %v1591 = vld [vmem:[%s1590] sm:$0xff]
    %v1592 = vld [vmem:[%s1590 + $0x8] sm:$0xff]
    %v1593 = vld [vmem:[%s1590 + $0x10] sm:$0xff]
    %v1594 = vld [vmem:[%s1590 + $0x18] sm:$0xff]
    %v1595 = vld [vmem:[%s1590 + $0x20] sm:$0xff]
    %v1596 = vld [vmem:[%s1590 + $0x28] sm:$0xff]
    %v1597 = vld [vmem:[%s1590 + $0x30] sm:$0xff]
    %v1598 = vld [vmem:[%s1590 + $0x38] sm:$0xf]
    %v1600 = vsel %vm98, %v1598, 0
    %1602 = vmatprep.subr.mxu0 0.0
    %1603 = vmatpush1.msra.mxu0 %v1591
    %1604 = vmatprep.subr.mxu0 0.0
    %1605 = vmatpush1.msra.mxu0 %v1592
    %1606 = vmatprep.subr.mxu0 0.0
    %1607 = vmatpush1.msra.mxu0 %v1593
    %1608 = vmatprep.subr.mxu0 0.0
    %1609 = vmatpush1.msra.mxu0 %v1594
    %1610 = vmatprep.subr.mxu0 0.0
    %1611 = vmatpush1.msra.mxu0 %v1595
    %1612 = vmatprep.subr.mxu0 0.0
    %1613 = vmatpush1.msra.mxu0 %v1596
    %1614 = vmatprep.subr.mxu0 0.0
    %1615 = vmatpush1.msra.mxu0 %v1597
    %1616 = vmatprep.subr.mxu0 0.0
    %1617 = vmatpush1.msra.mxu0 %v1600
    %1618 = vmatprep.subr.mxu0 0.0
    %1619 = vmatpush1.msra.mxu0 0.0
    %1620 = vmatprep.subr.mxu0 0.0
    %1621 = vmatpush1.msra.mxu0 0.0
    %1622 = vmatprep.subr.mxu0 0.0
    %1623 = vmatpush1.msra.mxu0 0.0
    %1624 = vmatprep.subr.mxu0 0.0
    %1625 = vmatpush1.msra.mxu0 0.0
    %1626 = vmatprep.subr.mxu0 0.0
    %1627 = vmatpush1.msra.mxu0 0.0
    %1628 = vmatprep.subr.mxu0 0.0
    %1629 = vmatpush1.msra.mxu0 0.0
    %1630 = vmatprep.subr.mxu0 0.0
    %1631 = vmatpush1.msra.mxu0 0.0
    %1632 = vmatprep.subr.mxu0 0.0
    %1633 = vmatpush1.msra.mxu0 0.0
    %1634 = vmatprep.subr.mxu0 0.0
    %1635 = vmatpush1.msra.mxu0 0.0
    %1636 = vmatprep.subr.mxu0 0.0
    %1637 = vmatpush1.msra.mxu0 0.0
    %1638 = vmatprep.subr.mxu0 0.0
    %1639 = vmatpush1.msra.mxu0 0.0
    %1640 = vmatprep.subr.mxu0 0.0
    %1641 = vmatpush1.msra.mxu0 0.0
    %1642 = vmatprep.subr.mxu0 0.0
    %1643 = vmatpush1.msra.mxu0 0.0
    %1644 = vmatprep.subr.mxu0 0.0
    %1645 = vmatpush1.msra.mxu0 0.0
    %1646 = vmatprep.subr.mxu0 0.0
    %1647 = vmatpush1.msra.mxu0 0.0
    %1648 = vmatprep.subr.mxu0 0.0
    %1649 = vmatpush1.msra.mxu0 0.0
    %1650 = vmatprep.subr.mxu0 0.0
    %1651 = vmatpush1.msra.mxu0 0.0
    %1652 = vmatprep.subr.mxu0 0.0
    %1653 = vmatpush1.msra.mxu0 0.0
    %1654 = vmatprep.subr.mxu0 0.0
    %1655 = vmatpush1.msra.mxu0 0.0
    %1656 = vmatprep.subr.mxu0 0.0
    %1657 = vmatpush1.msra.mxu0 0.0
    %1658 = vmatprep.subr.mxu0 0.0
    %1659 = vmatpush1.msra.mxu0 0.0
    %1660 = vmatprep.subr.mxu0 0.0
    %1661 = vmatpush1.msra.mxu0 0.0
    %1662 = vmatprep.subr.mxu0 0.0
    %1663 = vmatpush1.msra.mxu0 0.0
    %1664 = vmatprep.subr.mxu0 0.0
    %1665 = vmatpush1.msra.mxu0 0.0
    %1666 = vmatprep.mubr.f32.mxu0 0.0
    %1667 = vmatmul.mubr.f32.gmra.mrb[0].mxu0 %v1349
    %v1668 = vpop.f32.mrb[0].mxu0
    %v1669 = vadd.f32 0.0, %v1668
    %v1670 = vpop.f32.mrb[0].mxu0
    %1671 = vdwg.mxu0
    %v1672 = vmax.f32 %v1589, %v1669
    %v1673 = vld [vmem:[%s10] sm:$0x1]
    %v1674 = vld [vmem:[%s9] sm:$0xff]
    %v1675 = vld [vmem:[%s9 + $0x8] sm:$0x3f]
    %vm1676 = vcmask 113664
    %v1678 = vsel %vm1676, %v1672, 0
    %vm1680 = vcmask 1045504
    %v1682 = vsel %vm1680, %v1675, 0
    %1684 = vmatprep.subr.mxu0 0.0
    %1685 = vmatpush1.msra.mxu0 %v1674
    %1686 = vmatprep.subr.mxu0 0.0
    %1687 = vmatpush1.msra.mxu0 %v1682
    %1688 = vmatprep.subr.mxu0 0.0
    %1689 = vmatpush1.msra.mxu0 0.0
    %1690 = vmatprep.subr.mxu0 0.0
    %1691 = vmatpush1.msra.mxu0 0.0
    %1692 = vmatprep.subr.mxu0 0.0
    %1693 = vmatpush1.msra.mxu0 0.0
    %1694 = vmatprep.subr.mxu0 0.0
    %1695 = vmatpush1.msra.mxu0 0.0
    %1696 = vmatprep.subr.mxu0 0.0
    %1697 = vmatpush1.msra.mxu0 0.0
    %1698 = vmatprep.subr.mxu0 0.0
    %1699 = vmatpush1.msra.mxu0 0.0
    %1700 = vmatprep.subr.mxu0 0.0
    %1701 = vmatpush1.msra.mxu0 0.0
    %1702 = vmatprep.subr.mxu0 0.0
    %1703 = vmatpush1.msra.mxu0 0.0
    %1704 = vmatprep.subr.mxu0 0.0
    %1705 = vmatpush1.msra.mxu0 0.0
    %1706 = vmatprep.subr.mxu0 0.0
    %1707 = vmatpush1.msra.mxu0 0.0
    %1708 = vmatprep.subr.mxu0 0.0
    %1709 = vmatpush1.msra.mxu0 0.0
    %1710 = vmatprep.subr.mxu0 0.0
    %1711 = vmatpush1.msra.mxu0 0.0
    %1712 = vmatprep.subr.mxu0 0.0
    %1713 = vmatpush1.msra.mxu0 0.0
    %1714 = vmatprep.subr.mxu0 0.0
    %1715 = vmatpush1.msra.mxu0 0.0
    %1716 = vmatprep.subr.mxu0 0.0
    %1717 = vmatpush1.msra.mxu0 0.0
    %1718 = vmatprep.subr.mxu0 0.0
    %1719 = vmatpush1.msra.mxu0 0.0
    %1720 = vmatprep.subr.mxu0 0.0
    %1721 = vmatpush1.msra.mxu0 0.0
    %1722 = vmatprep.subr.mxu0 0.0
    %1723 = vmatpush1.msra.mxu0 0.0
    %1724 = vmatprep.subr.mxu0 0.0
    %1725 = vmatpush1.msra.mxu0 0.0
    %1726 = vmatprep.subr.mxu0 0.0
    %1727 = vmatpush1.msra.mxu0 0.0
    %1728 = vmatprep.subr.mxu0 0.0
    %1729 = vmatpush1.msra.mxu0 0.0
    %1730 = vmatprep.subr.mxu0 0.0
    %1731 = vmatpush1.msra.mxu0 0.0
    %1732 = vmatprep.subr.mxu0 0.0
    %1733 = vmatpush1.msra.mxu0 0.0
    %1734 = vmatprep.subr.mxu0 0.0
    %1735 = vmatpush1.msra.mxu0 0.0
    %1736 = vmatprep.subr.mxu0 0.0
    %1737 = vmatpush1.msra.mxu0 0.0
    %1738 = vmatprep.subr.mxu0 0.0
    %1739 = vmatpush1.msra.mxu0 0.0
    %1740 = vmatprep.subr.mxu0 0.0
    %1741 = vmatpush1.msra.mxu0 0.0
    %1742 = vmatprep.subr.mxu0 0.0
    %1743 = vmatpush1.msra.mxu0 0.0
    %1744 = vmatprep.subr.mxu0 0.0
    %1745 = vmatpush1.msra.mxu0 0.0
    %1746 = vmatprep.subr.mxu0 0.0
    %1747 = vmatpush1.msra.mxu0 0.0
    %1748 = vmatprep.mubr.f32.mxu0 0.0
    %1749 = vmatmul.mubr.f32.gmra.mrb[0].mxu0 %v1678
    %v1750 = vpop.f32.mrb[0].mxu0
    %v1751 = vadd.f32 0.0, %v1750
    %v1752 = vpop.f32.mrb[0].mxu0
    %1753 = vdwg.mxu0
    %v1754 = vadd.f32 %v1673, %v1751
    %s1755 = scalar_lea.vmem %s9, 16
    %v1756 = vld [vmem:[%s1755] sm:$0xff]
    %v1757 = vld [vmem:[%s1755 + $0x8] sm:$0x3f]
    %v1758 = vrot.slane %v1672, 1
    %v1759 = vsel %vm1676, %v1758, 0
    %v1762 = vsel %vm1680, %v1757, 0
    %1764 = vmatprep.subr.mxu0 0.0
    %1765 = vmatpush1.msra.mxu0 %v1756
    %1766 = vmatprep.subr.mxu0 0.0
    %1767 = vmatpush1.msra.mxu0 %v1762
    %1768 = vmatprep.subr.mxu0 0.0
    %1769 = vmatpush1.msra.mxu0 0.0
    %1770 = vmatprep.subr.mxu0 0.0
    %1771 = vmatpush1.msra.mxu0 0.0
    %1772 = vmatprep.subr.mxu0 0.0
    %1773 = vmatpush1.msra.mxu0 0.0
    %1774 = vmatprep.subr.mxu0 0.0
    %1775 = vmatpush1.msra.mxu0 0.0
    %1776 = vmatprep.subr.mxu0 0.0
    %1777 = vmatpush1.msra.mxu0 0.0
    %1778 = vmatprep.subr.mxu0 0.0
    %1779 = vmatpush1.msra.mxu0 0.0
    %1780 = vmatprep.subr.mxu0 0.0
    %1781 = vmatpush1.msra.mxu0 0.0
    %1782 = vmatprep.subr.mxu0 0.0
    %1783 = vmatpush1.msra.mxu0 0.0
    %1784 = vmatprep.subr.mxu0 0.0
    %1785 = vmatpush1.msra.mxu0 0.0
    %1786 = vmatprep.subr.mxu0 0.0
    %1787 = vmatpush1.msra.mxu0 0.0
    %1788 = vmatprep.subr.mxu0 0.0
    %1789 = vmatpush1.msra.mxu0 0.0
    %1790 = vmatprep.subr.mxu0 0.0
    %1791 = vmatpush1.msra.mxu0 0.0
    %1792 = vmatprep.subr.mxu0 0.0
    %1793 = vmatpush1.msra.mxu0 0.0
    %1794 = vmatprep.subr.mxu0 0.0
    %1795 = vmatpush1.msra.mxu0 0.0
    %1796 = vmatprep.subr.mxu0 0.0
    %1797 = vmatpush1.msra.mxu0 0.0
    %1798 = vmatprep.subr.mxu0 0.0
    %1799 = vmatpush1.msra.mxu0 0.0
    %1800 = vmatprep.subr.mxu0 0.0
    %1801 = vmatpush1.msra.mxu0 0.0
    %1802 = vmatprep.subr.mxu0 0.0
    %1803 = vmatpush1.msra.mxu0 0.0
    %1804 = vmatprep.subr.mxu0 0.0
    %1805 = vmatpush1.msra.mxu0 0.0
    %1806 = vmatprep.subr.mxu0 0.0
    %1807 = vmatpush1.msra.mxu0 0.0
    %1808 = vmatprep.subr.mxu0 0.0
    %1809 = vmatpush1.msra.mxu0 0.0
    %1810 = vmatprep.subr.mxu0 0.0
    %1811 = vmatpush1.msra.mxu0 0.0
    %1812 = vmatprep.subr.mxu0 0.0
    %1813 = vmatpush1.msra.mxu0 0.0
    %1814 = vmatprep.subr.mxu0 0.0
    %1815 = vmatpush1.msra.mxu0 0.0
    %1816 = vmatprep.subr.mxu0 0.0
    %1817 = vmatpush1.msra.mxu0 0.0
    %1818 = vmatprep.subr.mxu0 0.0
    %1819 = vmatpush1.msra.mxu0 0.0
    %1820 = vmatprep.subr.mxu0 0.0
    %1821 = vmatpush1.msra.mxu0 0.0
    %1822 = vmatprep.subr.mxu0 0.0
    %1823 = vmatpush1.msra.mxu0 0.0
    %1824 = vmatprep.subr.mxu0 0.0
    %1825 = vmatpush1.msra.mxu0 0.0
    %1826 = vmatprep.subr.mxu0 0.0
    %1827 = vmatpush1.msra.mxu0 0.0
    %1828 = vmatprep.mubr.f32.mxu0 0.0
    %1829 = vmatmul.mubr.f32.gmra.mrb[0].mxu0 %v1759
    %v1830 = vpop.f32.mrb[0].mxu0
    %v1831 = vadd.f32 0.0, %v1830
    %v1832 = vpop.f32.mrb[0].mxu0
    %1833 = vdwg.mxu0
    %v1834 = vadd.f32 %v1754, %v1831
    %s1835 = scalar_lea.vmem %s9, 32
    %v1836 = vld [vmem:[%s1835] sm:$0xff]
    %v1837 = vld [vmem:[%s1835 + $0x8] sm:$0x3f]
    %v1838 = vrot.slane %v1672, 2
    %v1839 = vsel %vm1676, %v1838, 0
    %v1842 = vsel %vm1680, %v1837, 0
    %1844 = vmatprep.subr.mxu0 0.0
    %1845 = vmatpush1.msra.mxu0 %v1836
    %1846 = vmatprep.subr.mxu0 0.0
    %1847 = vmatpush1.msra.mxu0 %v1842
    %1848 = vmatprep.subr.mxu0 0.0
    %1849 = vmatpush1.msra.mxu0 0.0
    %1850 = vmatprep.subr.mxu0 0.0
    %1851 = vmatpush1.msra.mxu0 0.0
    %1852 = vmatprep.subr.mxu0 0.0
    %1853 = vmatpush1.msra.mxu0 0.0
    %1854 = vmatprep.subr.mxu0 0.0
    %1855 = vmatpush1.msra.mxu0 0.0
    %1856 = vmatprep.subr.mxu0 0.0
    %1857 = vmatpush1.msra.mxu0 0.0
    %1858 = vmatprep.subr.mxu0 0.0
    %1859 = vmatpush1.msra.mxu0 0.0
    %1860 = vmatprep.subr.mxu0 0.0
    %1861 = vmatpush1.msra.mxu0 0.0
    %1862 = vmatprep.subr.mxu0 0.0
    %1863 = vmatpush1.msra.mxu0 0.0
    %1864 = vmatprep.subr.mxu0 0.0
    %1865 = vmatpush1.msra.mxu0 0.0
    %1866 = vmatprep.subr.mxu0 0.0
    %1867 = vmatpush1.msra.mxu0 0.0
    %1868 = vmatprep.subr.mxu0 0.0
    %1869 = vmatpush1.msra.mxu0 0.0
    %1870 = vmatprep.subr.mxu0 0.0
    %1871 = vmatpush1.msra.mxu0 0.0
    %1872 = vmatprep.subr.mxu0 0.0
    %1873 = vmatpush1.msra.mxu0 0.0
    %1874 = vmatprep.subr.mxu0 0.0
    %1875 = vmatpush1.msra.mxu0 0.0
    %1876 = vmatprep.subr.mxu0 0.0
    %1877 = vmatpush1.msra.mxu0 0.0
    %1878 = vmatprep.subr.mxu0 0.0
    %1879 = vmatpush1.msra.mxu0 0.0
    %1880 = vmatprep.subr.mxu0 0.0
    %1881 = vmatpush1.msra.mxu0 0.0
    %1882 = vmatprep.subr.mxu0 0.0
    %1883 = vmatpush1.msra.mxu0 0.0
    %1884 = vmatprep.subr.mxu0 0.0
    %1885 = vmatpush1.msra.mxu0 0.0
    %1886 = vmatprep.subr.mxu0 0.0
    %1887 = vmatpush1.msra.mxu0 0.0
    %1888 = vmatprep.subr.mxu0 0.0
    %1889 = vmatpush1.msra.mxu0 0.0
    %1890 = vmatprep.subr.mxu0 0.0
    %1891 = vmatpush1.msra.mxu0 0.0
    %1892 = vmatprep.subr.mxu0 0.0
    %1893 = vmatpush1.msra.mxu0 0.0
    %1894 = vmatprep.subr.mxu0 0.0
    %1895 = vmatpush1.msra.mxu0 0.0
    %1896 = vmatprep.subr.mxu0 0.0
    %1897 = vmatpush1.msra.mxu0 0.0
    %1898 = vmatprep.subr.mxu0 0.0
    %1899 = vmatpush1.msra.mxu0 0.0
    %1900 = vmatprep.subr.mxu0 0.0
    %1901 = vmatpush1.msra.mxu0 0.0
    %1902 = vmatprep.subr.mxu0 0.0
    %1903 = vmatpush1.msra.mxu0 0.0
    %1904 = vmatprep.subr.mxu0 0.0
    %1905 = vmatpush1.msra.mxu0 0.0
    %1906 = vmatprep.subr.mxu0 0.0
    %1907 = vmatpush1.msra.mxu0 0.0
    %1908 = vmatprep.mubr.f32.mxu0 0.0
    %1909 = vmatmul.mubr.f32.gmra.mrb[0].mxu0 %v1839
    %v1910 = vpop.f32.mrb[0].mxu0
    %v1911 = vadd.f32 0.0, %v1910
    %v1912 = vpop.f32.mrb[0].mxu0
    %1913 = vdwg.mxu0
    %v1914 = vadd.f32 %v1834, %v1911
    %s1915 = scalar_lea.vmem %s9, 48
    %v1916 = vld [vmem:[%s1915] sm:$0xff]
    %v1917 = vld [vmem:[%s1915 + $0x8] sm:$0x3f]
    %v1918 = vrot.slane %v1672, 3
    %v1919 = vsel %vm1676, %v1918, 0
    %v1922 = vsel %vm1680, %v1917, 0
    %1924 = vmatprep.subr.mxu0 0.0
    %1925 = vmatpush1.msra.mxu0 %v1916
    %1926 = vmatprep.subr.mxu0 0.0
    %1927 = vmatpush1.msra.mxu0 %v1922
    %1928 = vmatprep.subr.mxu0 0.0
    %1929 = vmatpush1.msra.mxu0 0.0
    %1930 = vmatprep.subr.mxu0 0.0
    %1931 = vmatpush1.msra.mxu0 0.0
    %1932 = vmatprep.subr.mxu0 0.0
    %1933 = vmatpush1.msra.mxu0 0.0
    %1934 = vmatprep.subr.mxu0 0.0
    %1935 = vmatpush1.msra.mxu0 0.0
    %1936 = vmatprep.subr.mxu0 0.0
    %1937 = vmatpush1.msra.mxu0 0.0
    %1938 = vmatprep.subr.mxu0 0.0
    %1939 = vmatpush1.msra.mxu0 0.0
    %1940 = vmatprep.subr.mxu0 0.0
    %1941 = vmatpush1.msra.mxu0 0.0
    %1942 = vmatprep.subr.mxu0 0.0
    %1943 = vmatpush1.msra.mxu0 0.0
    %1944 = vmatprep.subr.mxu0 0.0
    %1945 = vmatpush1.msra.mxu0 0.0
    %1946 = vmatprep.subr.mxu0 0.0
    %1947 = vmatpush1.msra.mxu0 0.0
    %1948 = vmatprep.subr.mxu0 0.0
    %1949 = vmatpush1.msra.mxu0 0.0
    %1950 = vmatprep.subr.mxu0 0.0
    %1951 = vmatpush1.msra.mxu0 0.0
    %1952 = vmatprep.subr.mxu0 0.0
    %1953 = vmatpush1.msra.mxu0 0.0
    %1954 = vmatprep.subr.mxu0 0.0
    %1955 = vmatpush1.msra.mxu0 0.0
    %1956 = vmatprep.subr.mxu0 0.0
    %1957 = vmatpush1.msra.mxu0 0.0
    %1958 = vmatprep.subr.mxu0 0.0
    %1959 = vmatpush1.msra.mxu0 0.0
    %1960 = vmatprep.subr.mxu0 0.0
    %1961 = vmatpush1.msra.mxu0 0.0
    %1962 = vmatprep.subr.mxu0 0.0
    %1963 = vmatpush1.msra.mxu0 0.0
    %1964 = vmatprep.subr.mxu0 0.0
    %1965 = vmatpush1.msra.mxu0 0.0
    %1966 = vmatprep.subr.mxu0 0.0
    %1967 = vmatpush1.msra.mxu0 0.0
    %1968 = vmatprep.subr.mxu0 0.0
    %1969 = vmatpush1.msra.mxu0 0.0
    %1970 = vmatprep.subr.mxu0 0.0
    %1971 = vmatpush1.msra.mxu0 0.0
    %1972 = vmatprep.subr.mxu0 0.0
    %1973 = vmatpush1.msra.mxu0 0.0
    %1974 = vmatprep.subr.mxu0 0.0
    %1975 = vmatpush1.msra.mxu0 0.0
    %1976 = vmatprep.subr.mxu0 0.0
    %1977 = vmatpush1.msra.mxu0 0.0
    %1978 = vmatprep.subr.mxu0 0.0
    %1979 = vmatpush1.msra.mxu0 0.0
    %1980 = vmatprep.subr.mxu0 0.0
    %1981 = vmatpush1.msra.mxu0 0.0
    %1982 = vmatprep.subr.mxu0 0.0
    %1983 = vmatpush1.msra.mxu0 0.0
    %1984 = vmatprep.subr.mxu0 0.0
    %1985 = vmatpush1.msra.mxu0 0.0
    %1986 = vmatprep.subr.mxu0 0.0
    %1987 = vmatpush1.msra.mxu0 0.0
    %1988 = vmatprep.mubr.f32.mxu0 0.0
    %1989 = vmatmul.mubr.f32.gmra.mrb[0].mxu0 %v1919
    %v1990 = vpop.f32.mrb[0].mxu0
    %v1991 = vadd.f32 0.0, %v1990
    %v1992 = vpop.f32.mrb[0].mxu0
    %1993 = vdwg.mxu0
    %v1994 = vadd.f32 %v1914, %v1991
    %vm1995 = vcmask 8192
    %1996 = vst.msk [vmem:[#allocation7] sm:$0x1] %vm1995, %v1994
    %v1997 = vld [vmem:[%s10] sm:$0x1]
    %v1998 = vld [vmem:[%s9] sm:$0xff]
    %v1999 = vld [vmem:[%s9 + $0x8] sm:$0x3f]
    %v2000 = vrot.slane %v1672, 4
    %v2001 = vsel %vm1676, %v2000, 0
    %v2004 = vsel %vm1680, %v1999, 0
    %2006 = vmatprep.subr.mxu0 0.0
    %2007 = vmatpush1.msra.mxu0 %v1998
    %2008 = vmatprep.subr.mxu0 0.0
    %2009 = vmatpush1.msra.mxu0 %v2004
    %2010 = vmatprep.subr.mxu0 0.0
    %2011 = vmatpush1.msra.mxu0 0.0
    %2012 = vmatprep.subr.mxu0 0.0
    %2013 = vmatpush1.msra.mxu0 0.0
    %2014 = vmatprep.subr.mxu0 0.0
    %2015 = vmatpush1.msra.mxu0 0.0
    %2016 = vmatprep.subr.mxu0 0.0
    %2017 = vmatpush1.msra.mxu0 0.0
    %2018 = vmatprep.subr.mxu0 0.0
    %2019 = vmatpush1.msra.mxu0 0.0
    %2020 = vmatprep.subr.mxu0 0.0
    %2021 = vmatpush1.msra.mxu0 0.0
    %2022 = vmatprep.subr.mxu0 0.0
    %2023 = vmatpush1.msra.mxu0 0.0
    %2024 = vmatprep.subr.mxu0 0.0
    %2025 = vmatpush1.msra.mxu0 0.0
    %2026 = vmatprep.subr.mxu0 0.0
    %2027 = vmatpush1.msra.mxu0 0.0
    %2028 = vmatprep.subr.mxu0 0.0
    %2029 = vmatpush1.msra.mxu0 0.0
    %2030 = vmatprep.subr.mxu0 0.0
    %2031 = vmatpush1.msra.mxu0 0.0
    %2032 = vmatprep.subr.mxu0 0.0
    %2033 = vmatpush1.msra.mxu0 0.0
    %2034 = vmatprep.subr.mxu0 0.0
    %2035 = vmatpush1.msra.mxu0 0.0
    %2036 = vmatprep.subr.mxu0 0.0
    %2037 = vmatpush1.msra.mxu0 0.0
    %2038 = vmatprep.subr.mxu0 0.0
    %2039 = vmatpush1.msra.mxu0 0.0
    %2040 = vmatprep.subr.mxu0 0.0
    %2041 = vmatpush1.msra.mxu0 0.0
    %2042 = vmatprep.subr.mxu0 0.0
    %2043 = vmatpush1.msra.mxu0 0.0
    %2044 = vmatprep.subr.mxu0 0.0
    %2045 = vmatpush1.msra.mxu0 0.0
    %2046 = vmatprep.subr.mxu0 0.0
    %2047 = vmatpush1.msra.mxu0 0.0
    %2048 = vmatprep.subr.mxu0 0.0
    %2049 = vmatpush1.msra.mxu0 0.0
    %2050 = vmatprep.subr.mxu0 0.0
    %2051 = vmatpush1.msra.mxu0 0.0
    %2052 = vmatprep.subr.mxu0 0.0
    %2053 = vmatpush1.msra.mxu0 0.0
    %2054 = vmatprep.subr.mxu0 0.0
    %2055 = vmatpush1.msra.mxu0 0.0
    %2056 = vmatprep.subr.mxu0 0.0
    %2057 = vmatpush1.msra.mxu0 0.0
    %2058 = vmatprep.subr.mxu0 0.0
    %2059 = vmatpush1.msra.mxu0 0.0
    %2060 = vmatprep.subr.mxu0 0.0
    %2061 = vmatpush1.msra.mxu0 0.0
    %2062 = vmatprep.subr.mxu0 0.0
    %2063 = vmatpush1.msra.mxu0 0.0
    %2064 = vmatprep.subr.mxu0 0.0
    %2065 = vmatpush1.msra.mxu0 0.0
    %2066 = vmatprep.subr.mxu0 0.0
    %2067 = vmatpush1.msra.mxu0 0.0
    %2068 = vmatprep.subr.mxu0 0.0
    %2069 = vmatpush1.msra.mxu0 0.0
    %2070 = vmatprep.mubr.f32.mxu0 0.0
    %2071 = vmatmul.mubr.f32.gmra.mrb[0].mxu0 %v2001
    %v2072 = vpop.f32.mrb[0].mxu0
    %v2073 = vadd.f32 0.0, %v2072
    %v2074 = vpop.f32.mrb[0].mxu0
    %2075 = vdwg.mxu0
    %v2076 = vadd.f32 %v1997, %v2073
    %v2077 = vld [vmem:[%s1755] sm:$0xff]
    %v2078 = vld [vmem:[%s1755 + $0x8] sm:$0x3f]
    %v2079 = vrot.slane %v1672, 5
    %v2080 = vsel %vm1676, %v2079, 0
    %v2083 = vsel %vm1680, %v2078, 0
    %2085 = vmatprep.subr.mxu0 0.0
    %2086 = vmatpush1.msra.mxu0 %v2077
    %2087 = vmatprep.subr.mxu0 0.0
    %2088 = vmatpush1.msra.mxu0 %v2083
    %2089 = vmatprep.subr.mxu0 0.0
    %2090 = vmatpush1.msra.mxu0 0.0
    %2091 = vmatprep.subr.mxu0 0.0
    %2092 = vmatpush1.msra.mxu0 0.0
    %2093 = vmatprep.subr.mxu0 0.0
    %2094 = vmatpush1.msra.mxu0 0.0
    %2095 = vmatprep.subr.mxu0 0.0
    %2096 = vmatpush1.msra.mxu0 0.0
    %2097 = vmatprep.subr.mxu0 0.0
    %2098 = vmatpush1.msra.mxu0 0.0
    %2099 = vmatprep.subr.mxu0 0.0
    %2100 = vmatpush1.msra.mxu0 0.0
    %2101 = vmatprep.subr.mxu0 0.0
    %2102 = vmatpush1.msra.mxu0 0.0
    %2103 = vmatprep.subr.mxu0 0.0
    %2104 = vmatpush1.msra.mxu0 0.0
    %2105 = vmatprep.subr.mxu0 0.0
    %2106 = vmatpush1.msra.mxu0 0.0
    %2107 = vmatprep.subr.mxu0 0.0
    %2108 = vmatpush1.msra.mxu0 0.0
    %2109 = vmatprep.subr.mxu0 0.0
    %2110 = vmatpush1.msra.mxu0 0.0
    %2111 = vmatprep.subr.mxu0 0.0
    %2112 = vmatpush1.msra.mxu0 0.0
    %2113 = vmatprep.subr.mxu0 0.0
    %2114 = vmatpush1.msra.mxu0 0.0
    %2115 = vmatprep.subr.mxu0 0.0
    %2116 = vmatpush1.msra.mxu0 0.0
    %2117 = vmatprep.subr.mxu0 0.0
    %2118 = vmatpush1.msra.mxu0 0.0
    %2119 = vmatprep.subr.mxu0 0.0
    %2120 = vmatpush1.msra.mxu0 0.0
    %2121 = vmatprep.subr.mxu0 0.0
    %2122 = vmatpush1.msra.mxu0 0.0
    %2123 = vmatprep.subr.mxu0 0.0
    %2124 = vmatpush1.msra.mxu0 0.0
    %2125 = vmatprep.subr.mxu0 0.0
    %2126 = vmatpush1.msra.mxu0 0.0
    %2127 = vmatprep.subr.mxu0 0.0
    %2128 = vmatpush1.msra.mxu0 0.0
    %2129 = vmatprep.subr.mxu0 0.0
    %2130 = vmatpush1.msra.mxu0 0.0
    %2131 = vmatprep.subr.mxu0 0.0
    %2132 = vmatpush1.msra.mxu0 0.0
    %2133 = vmatprep.subr.mxu0 0.0
    %2134 = vmatpush1.msra.mxu0 0.0
    %2135 = vmatprep.subr.mxu0 0.0
    %2136 = vmatpush1.msra.mxu0 0.0
    %2137 = vmatprep.subr.mxu0 0.0
    %2138 = vmatpush1.msra.mxu0 0.0
    %2139 = vmatprep.subr.mxu0 0.0
    %2140 = vmatpush1.msra.mxu0 0.0
    %2141 = vmatprep.subr.mxu0 0.0
    %2142 = vmatpush1.msra.mxu0 0.0
    %2143 = vmatprep.subr.mxu0 0.0
    %2144 = vmatpush1.msra.mxu0 0.0
    %2145 = vmatprep.subr.mxu0 0.0
    %2146 = vmatpush1.msra.mxu0 0.0
    %2147 = vmatprep.subr.mxu0 0.0
    %2148 = vmatpush1.msra.mxu0 0.0
    %2149 = vmatprep.mubr.f32.mxu0 0.0
    %2150 = vmatmul.mubr.f32.gmra.mrb[0].mxu0 %v2080
    %v2151 = vpop.f32.mrb[0].mxu0
    %v2152 = vadd.f32 0.0, %v2151
    %v2153 = vpop.f32.mrb[0].mxu0
    %2154 = vdwg.mxu0
    %v2155 = vadd.f32 %v2076, %v2152
    %v2156 = vld [vmem:[%s1835] sm:$0xff]
    %v2157 = vld [vmem:[%s1835 + $0x8] sm:$0x3f]
    %v2158 = vrot.slane %v1672, 6
    %v2159 = vsel %vm1676, %v2158, 0
    %v2162 = vsel %vm1680, %v2157, 0
    %2164 = vmatprep.subr.mxu0 0.0
    %2165 = vmatpush1.msra.mxu0 %v2156
    %2166 = vmatprep.subr.mxu0 0.0
    %2167 = vmatpush1.msra.mxu0 %v2162
    %2168 = vmatprep.subr.mxu0 0.0
    %2169 = vmatpush1.msra.mxu0 0.0
    %2170 = vmatprep.subr.mxu0 0.0
    %2171 = vmatpush1.msra.mxu0 0.0
    %2172 = vmatprep.subr.mxu0 0.0
    %2173 = vmatpush1.msra.mxu0 0.0
    %2174 = vmatprep.subr.mxu0 0.0
    %2175 = vmatpush1.msra.mxu0 0.0
    %2176 = vmatprep.subr.mxu0 0.0
    %2177 = vmatpush1.msra.mxu0 0.0
    %2178 = vmatprep.subr.mxu0 0.0
    %2179 = vmatpush1.msra.mxu0 0.0
    %2180 = vmatprep.subr.mxu0 0.0
    %2181 = vmatpush1.msra.mxu0 0.0
    %2182 = vmatprep.subr.mxu0 0.0
    %2183 = vmatpush1.msra.mxu0 0.0
    %2184 = vmatprep.subr.mxu0 0.0
    %2185 = vmatpush1.msra.mxu0 0.0
    %2186 = vmatprep.subr.mxu0 0.0
    %2187 = vmatpush1.msra.mxu0 0.0
    %2188 = vmatprep.subr.mxu0 0.0
    %2189 = vmatpush1.msra.mxu0 0.0
    %2190 = vmatprep.subr.mxu0 0.0
    %2191 = vmatpush1.msra.mxu0 0.0
    %2192 = vmatprep.subr.mxu0 0.0
    %2193 = vmatpush1.msra.mxu0 0.0
    %2194 = vmatprep.subr.mxu0 0.0
    %2195 = vmatpush1.msra.mxu0 0.0
    %2196 = vmatprep.subr.mxu0 0.0
    %2197 = vmatpush1.msra.mxu0 0.0
    %2198 = vmatprep.subr.mxu0 0.0
    %2199 = vmatpush1.msra.mxu0 0.0
    %2200 = vmatprep.subr.mxu0 0.0
    %2201 = vmatpush1.msra.mxu0 0.0
    %2202 = vmatprep.subr.mxu0 0.0
    %2203 = vmatpush1.msra.mxu0 0.0
    %2204 = vmatprep.subr.mxu0 0.0
    %2205 = vmatpush1.msra.mxu0 0.0
    %2206 = vmatprep.subr.mxu0 0.0
    %2207 = vmatpush1.msra.mxu0 0.0
    %2208 = vmatprep.subr.mxu0 0.0
    %2209 = vmatpush1.msra.mxu0 0.0
    %2210 = vmatprep.subr.mxu0 0.0
    %2211 = vmatpush1.msra.mxu0 0.0
    %2212 = vmatprep.subr.mxu0 0.0
    %2213 = vmatpush1.msra.mxu0 0.0
    %2214 = vmatprep.subr.mxu0 0.0
    %2215 = vmatpush1.msra.mxu0 0.0
    %2216 = vmatprep.subr.mxu0 0.0
    %2217 = vmatpush1.msra.mxu0 0.0
    %2218 = vmatprep.subr.mxu0 0.0
    %2219 = vmatpush1.msra.mxu0 0.0
    %2220 = vmatprep.subr.mxu0 0.0
    %2221 = vmatpush1.msra.mxu0 0.0
    %2222 = vmatprep.subr.mxu0 0.0
    %2223 = vmatpush1.msra.mxu0 0.0
    %2224 = vmatprep.subr.mxu0 0.0
    %2225 = vmatpush1.msra.mxu0 0.0
    %2226 = vmatprep.subr.mxu0 0.0
    %2227 = vmatpush1.msra.mxu0 0.0
    %2228 = vmatprep.mubr.f32.mxu0 0.0
    %2229 = vmatmul.mubr.f32.gmra.mrb[0].mxu0 %v2159
    %v2230 = vpop.f32.mrb[0].mxu0
    %v2231 = vadd.f32 0.0, %v2230
    %v2232 = vpop.f32.mrb[0].mxu0
    %2233 = vdwg.mxu0
    %v2234 = vadd.f32 %v2155, %v2231
    %v2235 = vld [vmem:[%s1915] sm:$0xff]
    %v2236 = vld [vmem:[%s1915 + $0x8] sm:$0x3f]
    %v2237 = vrot.slane %v1672, 7
    %v2238 = vsel %vm1676, %v2237, 0
    %v2241 = vsel %vm1680, %v2236, 0
    %2243 = vmatprep.subr.mxu0 0.0
    %2244 = vmatpush1.msra.mxu0 %v2235
    %2245 = vmatprep.subr.mxu0 0.0
    %2246 = vmatpush1.msra.mxu0 %v2241
    %2247 = vmatprep.subr.mxu0 0.0
    %2248 = vmatpush1.msra.mxu0 0.0
    %2249 = vmatprep.subr.mxu0 0.0
    %2250 = vmatpush1.msra.mxu0 0.0
    %2251 = vmatprep.subr.mxu0 0.0
    %2252 = vmatpush1.msra.mxu0 0.0
    %2253 = vmatprep.subr.mxu0 0.0
    %2254 = vmatpush1.msra.mxu0 0.0
    %2255 = vmatprep.subr.mxu0 0.0
    %2256 = vmatpush1.msra.mxu0 0.0
    %2257 = vmatprep.subr.mxu0 0.0
    %2258 = vmatpush1.msra.mxu0 0.0
    %2259 = vmatprep.subr.mxu0 0.0
    %2260 = vmatpush1.msra.mxu0 0.0
    %2261 = vmatprep.subr.mxu0 0.0
    %2262 = vmatpush1.msra.mxu0 0.0
    %2263 = vmatprep.subr.mxu0 0.0
    %2264 = vmatpush1.msra.mxu0 0.0
    %2265 = vmatprep.subr.mxu0 0.0
    %2266 = vmatpush1.msra.mxu0 0.0
    %2267 = vmatprep.subr.mxu0 0.0
    %2268 = vmatpush1.msra.mxu0 0.0
    %2269 = vmatprep.subr.mxu0 0.0
    %2270 = vmatpush1.msra.mxu0 0.0
    %2271 = vmatprep.subr.mxu0 0.0
    %2272 = vmatpush1.msra.mxu0 0.0
    %2273 = vmatprep.subr.mxu0 0.0
    %2274 = vmatpush1.msra.mxu0 0.0
    %2275 = vmatprep.subr.mxu0 0.0
    %2276 = vmatpush1.msra.mxu0 0.0
    %2277 = vmatprep.subr.mxu0 0.0
    %2278 = vmatpush1.msra.mxu0 0.0
    %2279 = vmatprep.subr.mxu0 0.0
    %2280 = vmatpush1.msra.mxu0 0.0
    %2281 = vmatprep.subr.mxu0 0.0
    %2282 = vmatpush1.msra.mxu0 0.0
    %2283 = vmatprep.subr.mxu0 0.0
    %2284 = vmatpush1.msra.mxu0 0.0
    %2285 = vmatprep.subr.mxu0 0.0
    %2286 = vmatpush1.msra.mxu0 0.0
    %2287 = vmatprep.subr.mxu0 0.0
    %2288 = vmatpush1.msra.mxu0 0.0
    %2289 = vmatprep.subr.mxu0 0.0
    %2290 = vmatpush1.msra.mxu0 0.0
    %2291 = vmatprep.subr.mxu0 0.0
    %2292 = vmatpush1.msra.mxu0 0.0
    %2293 = vmatprep.subr.mxu0 0.0
    %2294 = vmatpush1.msra.mxu0 0.0
    %2295 = vmatprep.subr.mxu0 0.0
    %2296 = vmatpush1.msra.mxu0 0.0
    %2297 = vmatprep.subr.mxu0 0.0
    %2298 = vmatpush1.msra.mxu0 0.0
    %2299 = vmatprep.subr.mxu0 0.0
    %2300 = vmatpush1.msra.mxu0 0.0
    %2301 = vmatprep.subr.mxu0 0.0
    %2302 = vmatpush1.msra.mxu0 0.0
    %2303 = vmatprep.subr.mxu0 0.0
    %2304 = vmatpush1.msra.mxu0 0.0
    %2305 = vmatprep.subr.mxu0 0.0
    %2306 = vmatpush1.msra.mxu0 0.0
    %2307 = vmatprep.mubr.f32.mxu0 0.0
    %2308 = vmatmul.mubr.f32.gmra.mrb[0].mxu0 %v2238
    %v2309 = vpop.f32.mrb[0].mxu0
    %v2310 = vadd.f32 0.0, %v2309
    %v2311 = vpop.f32.mrb[0].mxu0
    %2312 = vdwg.mxu0
    %v2313 = vadd.f32 %v2234, %v2310
    %2314 = vst.msk [vmem:[#allocation7 + $0x1] sm:$0x1] %vm1995, %v2313
    // Predicated region
    $region54: #{forward.1} parent=1 // pred_check
      _
    $region55: #{forward.1} parent=1 // pred_check_branch
      %2316 = sbr.rel (0) target = $region57
    $region56: #{forward.1} parent=1 // pred_region
      %s2318 = ssub.s32 32, 32
      %2319 = vsyncadd [#allocation4], %s2318
      %s2321 = sshll.u32 [#allocation7], 4
      %s2322 = int_to_ptr.vmem [resolvable:$true] %s2321
      %2324 = dma.vmem_to_hbm [thread:$0]  %s2322, 32, %s11, [#allocation4]
    $region57: #{forward.1} parent=1 // pred_fallthru
      _
    // Predicated region
    $region58: #{forward.1} parent=1 // pred_check
      _
    $region59: #{forward.1} parent=1 // pred_check_branch
      %2326 = sbr.rel (0) target = $region61
    $region60: #{forward.1} parent=1 // pred_region
      %2327 = dma.done [#allocation4], 32
    $region61: #{forward.1} parent=1 // pred_fallthru
      _
    %2328 = vsyncpa [#allocation3], 1
    %2329 = vsyncpa [#allocation6], 1
    %2330 = vsyncpa [#allocation4], 1

</llo_original>
